<compile_context>
chip_gen: v7x
topology: tpu7x:2x2x1
jax: 0.10.0
libtpu: 0.0.40
codegen_flags: <defaults>
</compile_context>

<pallas_src>
import jax
import jax.numpy as jnp
from jax.experimental import pallas as pl
from jax.experimental.pallas import tpu as pltpu

BN_EPS = 1e-5
BRANCH_KS = (3, 5, 7)

# --------------------------- static geometry (L = 30) ------------------------
C_BR = 64                  # branch channel width
K_PRE = 32                 # 7*C_in (=28) padded to 32
L_IN = 30                  # input length implied by fc Linear(704, ...)
L0 = (L_IN + 2 * 3 - 7) // 2 + 1        # pre_conv output length = 15
N_EVEN = (L0 + 1) // 2                  # 8  (x0 positions 0,2,...)
N_ODD = L0 // 2                         # 7  (x0 positions 1,3,...)
ROWS_PER_B = 16                         # per-sample pre_conv im2col rows (padded)
assert L0 % 2 == 1 and N_EVEN == 8


def _branch_geom(k):
    l_out_a = (L0 + 2 - k) // 2 + 1     # conv_a (s=2, p=1) output length
    l2 = l_out_a + 3 - k                # conv_b (s=1, p=1) output length
    return l_out_a, l2


def _build_offsets():
    wa_off, cur = {}, K_PRE
    for k in BRANCH_KS:
        wa_off[k] = cur
        cur += k * 128
    w1_off = cur
    n_pos = 0
    for k in BRANCH_KS:
        _, l2 = _branch_geom(k)
        n_pos += l2 - (2 if k != 7 else 0)   # AvgPool1d(3,1) on the 3/5 branches
    wpack_rows = w1_off + n_pos * C_BR
    wb_off, cur2 = {}, 0
    for k in BRANCH_KS:
        wb_off[k] = cur2
        cur2 += k * C_BR
    w2_off = cur2
    wbpack_rows = w2_off + 128
    return wa_off, w1_off, wpack_rows, wb_off, w2_off, wbpack_rows, n_pos


WA_OFF, W1_OFF, WPACK_ROWS, WB_OFF, W2_OFF, WBPACK_ROWS, N_POS = _build_offsets()
N_BIAS_ROWS = 11
assert N_POS * C_BR == 704


# ------------------------------ fused kernel --------------------------------

def _predictor_kernel(xim_ref, wpack_ref, wbpack_ref, bias_ref, o_ref):
    f32 = jnp.float32

    # pre_conv: host already did the stride-2 im2col and reordered rows into
    # [even positions | odd positions | zero pad] -> one (16,32)@(32,128) dot.
    x_all = xim_ref[0]                                        # (16, 32)
    x0_all = jnp.dot(x_all, wpack_ref[0:K_PRE, :],
                     preferred_element_type=f32)
    x0_all = jnp.maximum(x0_all + bias_ref[0:1, :], 0.0)      # BN + ReLU

    even_pl = x0_all[0:N_EVEN, :]                             # x0[0], x0[2], ...
    zrow128 = jnp.zeros((1, 128), f32)
    odd_pl = jnp.concatenate(                                 # [0, x0[1], x0[3], ..., 0]
        [zrow128, x0_all[N_EVEN:N_EVEN + N_ODD, :], zrow128], axis=0)

    zrow64 = jnp.zeros((1, C_BR), f32)
    flat_pieces = []
    for j, k in enumerate(BRANCH_KS):
        l_out_a, l2 = _branch_geom(k)

        # conv_a (s=2, p=1) fused with the 1x1 s=2 downsample: im2col along the
        # lane axis, one (l_out_a, k*128) @ (k*128, 128) matmul.  Every stride-2
        # tap is a contiguous slice of the even/odd position planes.
        taps = []
        for t in range(k):
            if t % 2 == 1:
                s = (t - 1) // 2
                taps.append(even_pl[s:s + l_out_a, :])
            else:
                s = t // 2
                taps.append(odd_pl[s:s + l_out_a, :])
        col_a = jnp.concatenate(taps, axis=1)                 # (l_out_a, k*128)
        hr = jnp.dot(col_a, wpack_ref[WA_OFF[k]:WA_OFF[k] + k * 128, :],
                     preferred_element_type=f32)
        hr = jnp.maximum(hr + bias_ref[1 + j:2 + j, :], 0.0)  # BN + ReLU (both paths)
        h = hr[:, 0:C_BR]                                     # conv_a path
        res = hr[:, C_BR:2 * C_BR]                            # downsample path

        # conv_b (s=1, p=1): im2col along lanes, one (l2, k*64) @ (k*64, 64) dot.
        hp = jnp.concatenate([zrow64, h, zrow64], axis=0)     # pad = 1
        col_b = jnp.concatenate([hp[t:t + l2, :] for t in range(k)], axis=1)
        o = jnp.dot(col_b, wbpack_ref[WB_OFF[k]:WB_OFF[k] + k * C_BR, :],
                    preferred_element_type=f32)
        o = jnp.maximum(o + bias_ref[4 + j:5 + j, 0:C_BR], 0.0)   # BN + ReLU
        o = jnp.maximum(o + res[0:l2, :], 0.0)                # += residual[:, :, 0:l2]; ReLU
        if k != 7:                                            # AvgPool1d(k=3, s=1)
            o = (o[0:l2 - 2, :] + o[1:l2 - 1, :] + o[2:l2, :]) * (1.0 / 3.0)

        for p_ in range(o.shape[0]):                          # flatten rows -> lanes
            flat_pieces.append(o[p_:p_ + 1, :])

    # fc stack: fc1 is ONE K=704 matmul; torch.flatten ordering folded into w1.
    flat = jnp.concatenate(flat_pieces, axis=1)               # (1, 704)
    h1 = jnp.maximum(
        jnp.dot(flat, wpack_ref[W1_OFF:W1_OFF + N_POS * C_BR, :],
                preferred_element_type=f32) + bias_ref[7:8, :], 0.0)
    h2 = jnp.maximum(
        jnp.dot(h1, wbpack_ref[W2_OFF:W2_OFF + 128, 0:32],
                preferred_element_type=f32) + bias_ref[8:9, 0:32], 0.0)
    # final Linear(32, 1) as a lane reduction (avoids an N=1 matmul).
    val = (jnp.sum(h2 * bias_ref[9:10, 0:32], axis=1, keepdims=True)
           + bias_ref[10:11, 0:1])                            # (1, 1)
    o_ref[0] = jnp.broadcast_to(val, (1, 128))                # lane-dense store


# ------------------------------ host wrapper ---------------------------------

def predictor_forward(e, kp):
    """e: (B, C_in, L=30) float32 NCL input; kp: packed, BN-folded params."""
    B, c_in, L = e.shape
    assert L == L_IN and 7 * c_in <= K_PRE

    x = jnp.pad(e.astype(jnp.float32), ((0, 0), (0, 0), (3, 3)))   # pad = 3
    xpad = x.transpose(0, 2, 1)                                    # (B, L+6, C_in)

    # Host-side stride-2 im2col for pre_conv (input is ~1 KB), cols = t*C_in + c.
    slabs = [xpad[:, t:t + 2 * L0:2, :] for t in range(7)]
    xim = jnp.stack(slabs, axis=2).reshape(B, L0, 7 * c_in)
    xim = jnp.pad(xim, ((0, 0), (0, 0), (0, K_PRE - 7 * c_in)))
    # Row reorder: even output positions first, then odd, then one zero row.
    xim = jnp.concatenate(
        [xim[:, 0::2, :], xim[:, 1::2, :],
         jnp.zeros((B, ROWS_PER_B - L0, K_PRE), jnp.float32)], axis=1)

    out = pl.pallas_call(
        _predictor_kernel,
        grid=(B,),
        in_specs=[
            pl.BlockSpec((1, ROWS_PER_B, K_PRE), lambda b: (b, 0, 0)),
            pl.BlockSpec((WPACK_ROWS, 128), lambda b: (0, 0)),
            pl.BlockSpec((WBPACK_ROWS, C_BR), lambda b: (0, 0)),
            pl.BlockSpec((N_BIAS_ROWS, 128), lambda b: (0, 0)),
        ],
        out_specs=pl.BlockSpec((1, 1, 128), lambda b: (b, 0, 0)),
        out_shape=jax.ShapeDtypeStruct((B, 1, 128), jnp.float32),
        compiler_params=pltpu.CompilerParams(
            dimension_semantics=("parallel",)),   # megacore batch split on v7x
    )(xim, kp['wpack'], kp['wbpack'], kp['bias'])
    return out[:, 0, 0]                            # matches torch `out.squeeze()`


# ------------------------------ parameters -----------------------------------

def make_params(key, c_in):
    """Raw (PyTorch-layout) parameters with synthetic BN running stats."""
    keys = iter(jax.random.split(key, 128))
    p = {}

    def conv_w(co, ci, k):
        return (jax.random.normal(next(keys), (co, ci, k), jnp.float32)
                / jnp.sqrt(float(ci * k)))

    def bn(c):
        gamma = 1.0 + 0.1 * jax.random.normal(next(keys), (c,), jnp.float32)
        beta = 0.1 * jax.random.normal(next(keys), (c,), jnp.float32)
        mean = 0.1 * jax.random.normal(next(keys), (c,), jnp.float32)
        var = 1.0 + 0.1 * jax.random.uniform(next(keys), (c,), jnp.float32)
        scale = gamma / jnp.sqrt(var + BN_EPS)
        shift = beta - mean * scale
        return scale, shift

    def linear(o, i):
        w = jax.random.normal(next(keys), (i, o), jnp.float32) / jnp.sqrt(float(i))
        b = 0.1 * jax.random.normal(next(keys), (o,), jnp.float32)
        return w, b

    p['pre_w'] = conv_w(128, c_in, 7)
    p['pre_s'], p['pre_sh'] = bn(128)
    for k in BRANCH_KS:
        p[f'w{k}a'] = conv_w(64, 128, k)
        p[f's{k}a'], p[f'sh{k}a'] = bn(64)
        p[f'w{k}b'] = conv_w(64, 64, k)
        p[f's{k}b'], p[f'sh{k}b'] = bn(64)
        p[f'w{k}d'] = conv_w(64, 128, 1)
        p[f's{k}d'], p[f'sh{k}d'] = bn(64)
    p['fc1_w'], p['fc1_b'] = linear(128, 704)
    p['fc1_s'], p['fc1_sh'] = bn(128)
    p['fc2_w'], p['fc2_b'] = linear(32, 128)
    p['fc2_s'], p['fc2_sh'] = bn(32)
    p['fc3_w'], p['fc3_b'] = linear(1, 32)
    return p


def fold_params(p, c_in):
    """One-time host folding: BN into weights, tap-major layouts, packed arrays."""
    def conv_taps(w, scale):          # (Co, Ci, K) -> (K, Ci, Co), BN scale folded
        return w.transpose(2, 1, 0) * scale[None, None, :]

    wpre = conv_taps(p['pre_w'], p['pre_s']).reshape(7 * c_in, 128)
    wpre = jnp.pad(wpre, ((0, K_PRE - 7 * c_in), (0, 0)))          # (32, 128)

    wa_blocks, wb_blocks, ba_rows, bb_rows = [], [], [], []
    for k in BRANCH_KS:
        wa = conv_taps(p[f'w{k}a'], p[f's{k}a'])                   # (k, 128, 64)
        wd = conv_taps(p[f'w{k}d'], p[f's{k}d'])                   # (1, 128, 64)
        wcomb = jnp.zeros((k, 128, 128), jnp.float32)
        wcomb = wcomb.at[:, :, 0:C_BR].set(wa)
        wcomb = wcomb.at[1, :, C_BR:].set(wd[0])   # downsample = tap t=1 of padded window
        wa_blocks.append(wcomb.reshape(k * 128, 128))
        ba_rows.append(jnp.concatenate(
            [p[f'sh{k}a'], p[f'sh{k}d']]).reshape(1, 128))
        wb_blocks.append(conv_taps(p[f'w{k}b'], p[f's{k}b']).reshape(k * C_BR, C_BR))
        bb_rows.append(jnp.pad(p[f'sh{k}b'].reshape(1, C_BR),
                               ((0, 0), (0, 128 - C_BR))))

    # fc1: torch.flatten index = c*N_POS + pos  ->  kernel index = pos*64 + c.
    w1 = (p['fc1_w'] * p['fc1_s'][None, :]).reshape(C_BR, N_POS, 128)
    w1 = w1.transpose(1, 0, 2).reshape(N_POS * C_BR, 128)

    kp = {}
    kp['wpack'] = jnp.concatenate([wpre] + wa_blocks + [w1], axis=0)

    w2 = jnp.pad(p['fc2_w'] * p['fc2_s'][None, :], ((0, 0), (0, C_BR - 32)))
    kp['wbpack'] = jnp.concatenate(wb_blocks + [w2], axis=0)

    def row128(v):
        v = v.reshape(1, -1)
        return jnp.pad(v, ((0, 0), (0, 128 - v.shape[1])))

    bias_rows = ([row128(p['pre_sh'])] + ba_rows + bb_rows +
                 [row128(p['fc1_b'] * p['fc1_s'] + p['fc1_sh']),
                  row128(p['fc2_b'] * p['fc2_s'] + p['fc2_sh']),
                  row128(p['fc3_w'].reshape(-1)),      # fc3 weight as a lane row
                  row128(p['fc3_b'])])
    kp['bias'] = jnp.concatenate(bias_rows, axis=0)    # (11, 128)

    assert kp['wpack'].shape == (WPACK_ROWS, 128)
    assert kp['wbpack'].shape == (WBPACK_ROWS, C_BR)
    assert kp['bias'].shape == (N_BIAS_ROWS, 128)
    return kp


# ----------------------------------- main -------------------------------------

if __name__ == "__main__":
    B, C_IN = 2, 4   # L=30 -> 64*11 = 704 flattened features, matching the fc
    key = jax.random.PRNGKey(0)
    pkey, xkey = jax.random.split(key)
    raw_params = make_params(pkey, C_IN)
    kparams = fold_params(raw_params, C_IN)
    e = jax.random.normal(xkey, (B, C_IN, L_IN), dtype=jnp.float32)

    fwd = jax.jit(lambda inp: predictor_forward(inp, kparams))
    out = fwd(e)
    jax.block_until_ready(out)
    assert out.shape == (B,), f"unexpected output shape {out.shape}"
    assert bool(jnp.all(jnp.isfinite(out)))
    print("KERNEL_OK")
</pallas_src>

<mosaic_0001>
module attributes {stable_mosaic.version = 11 : i64} {
  func.func @_predictor_kernel(%arg0: i32, %arg1: memref<1x16x32xf32, #tpu.memory_space<vmem>>, %arg2: memref<2656x128xf32, #tpu.memory_space<vmem>>, %arg3: memref<1088x64xf32, #tpu.memory_space<vmem>>, %arg4: memref<11x128xf32, #tpu.memory_space<vmem>>, %arg5: memref<1x1x128xf32, #tpu.memory_space<vmem>>) attributes {dimension_semantics = [#tpu.dimension_semantics<parallel>], iteration_bounds = array<i64: 2>, scalar_prefetch = 0 : i64, scratch_operands = 0 : i64, tpu.core_type = #tpu.core_type<tc>, window_params = [{transform_indices = @transform_0, window_bounds = array<i64: 1, 16, 32>}, {pipeline_mode = #tpu.pipeline_mode<synchronous>, transform_indices = @transform_1, window_bounds = array<i64: 2656, 128>}, {pipeline_mode = #tpu.pipeline_mode<synchronous>, transform_indices = @transform_2, window_bounds = array<i64: 1088, 64>}, {pipeline_mode = #tpu.pipeline_mode<synchronous>, transform_indices = @transform_3, window_bounds = array<i64: 11, 128>}, {transform_indices = @transform_4, window_bounds = array<i64: 1, 1, 128>}]} {
    %c0 = arith.constant 0 : index
    %c0_0 = arith.constant 0 : index
    %c0_1 = arith.constant 0 : index
    %0 = vector.load %arg1[%c0, %c0_0, %c0_1] : memref<1x16x32xf32, #tpu.memory_space<vmem>>, vector<1x16x32xf32>
    %1 = vector.shape_cast %0 : vector<1x16x32xf32> to vector<16x32xf32>
    %c0_2 = arith.constant 0 : index
    %c0_3 = arith.constant 0 : index
    %2 = vector.load %arg2[%c0_2, %c0_3] : memref<2656x128xf32, #tpu.memory_space<vmem>>, vector<32x128xf32>
    %cst = arith.constant dense<0.000000e+00> : vector<16x128xf32>
    %3 = tpu.matmul %1, %2, %cst {dimension_numbers = #tpu.dot_dimension_numbers<[1], [0], [0], [1], [0, 0, 1, 1], [], []>} : vector<16x32xf32>, vector<32x128xf32>, vector<16x128xf32> -> vector<16x128xf32>
    %c0_4 = arith.constant 0 : index
    %c0_5 = arith.constant 0 : index
    %4 = vector.load %arg4[%c0_4, %c0_5] : memref<11x128xf32, #tpu.memory_space<vmem>>, vector<1x128xf32>
    %5 = vector.broadcast %4 : vector<1x128xf32> to vector<16x128xf32>
    %6 = arith.addf %3, %5 : vector<16x128xf32>
    %cst_6 = arith.constant 0.000000e+00 : f32
    %7 = vector.broadcast %cst_6 : f32 to vector<16x128xf32>
    %8 = arith.maximumf %6, %7 : vector<16x128xf32>
    %9 = vector.extract_strided_slice %8 {offsets = [0, 0], sizes = [8, 128], strides = [1, 1]} : vector<16x128xf32> to vector<8x128xf32>
    %cst_7 = arith.constant 0.000000e+00 : f32
    %10 = vector.broadcast %cst_7 : f32 to vector<1x128xf32>
    %11 = vector.extract_strided_slice %8 {offsets = [8, 0], sizes = [7, 128], strides = [1, 1]} : vector<16x128xf32> to vector<7x128xf32>
    %12 = tpu.concatenate %10, %11, %10 in 0 : vector<1x128xf32>, vector<7x128xf32>, vector<1x128xf32> -> vector<9x128xf32>
    %cst_8 = arith.constant 0.000000e+00 : f32
    %13 = vector.broadcast %cst_8 : f32 to vector<1x64xf32>
    %14 = vector.extract_strided_slice %12 {offsets = [0, 0], sizes = [8, 128], strides = [1, 1]} : vector<9x128xf32> to vector<8x128xf32>
    %15 = vector.extract_strided_slice %12 {offsets = [1, 0], sizes = [8, 128], strides = [1, 1]} : vector<9x128xf32> to vector<8x128xf32>
    %16 = tpu.concatenate %14, %9, %15 in 1 : vector<8x128xf32>, vector<8x128xf32>, vector<8x128xf32> -> vector<8x384xf32>
    %c32 = arith.constant 32 : index
    %c0_9 = arith.constant 0 : index
    %17 = vector.load %arg2[%c32, %c0_9] : memref<2656x128xf32, #tpu.memory_space<vmem>>, vector<384x128xf32>
    %cst_10 = arith.constant dense<0.000000e+00> : vector<8x128xf32>
    %18 = tpu.matmul %16, %17, %cst_10 {dimension_numbers = #tpu.dot_dimension_numbers<[1], [0], [0], [1], [0, 0, 1, 1], [], []>} : vector<8x384xf32>, vector<384x128xf32>, vector<8x128xf32> -> vector<8x128xf32>
    %c1 = arith.constant 1 : index
    %c0_11 = arith.constant 0 : index
    %19 = vector.load %arg4[%c1, %c0_11] : memref<11x128xf32, #tpu.memory_space<vmem>>, vector<1x128xf32>
    %20 = vector.broadcast %19 : vector<1x128xf32> to vector<8x128xf32>
    %21 = arith.addf %18, %20 : vector<8x128xf32>
    %cst_12 = arith.constant 0.000000e+00 : f32
    %22 = vector.broadcast %cst_12 : f32 to vector<8x128xf32>
    %23 = arith.maximumf %21, %22 : vector<8x128xf32>
    %24 = vector.extract_strided_slice %23 {offsets = [0, 0], sizes = [8, 64], strides = [1, 1]} : vector<8x128xf32> to vector<8x64xf32>
    %25 = vector.extract_strided_slice %23 {offsets = [0, 64], sizes = [8, 64], strides = [1, 1]} : vector<8x128xf32> to vector<8x64xf32>
    %26 = tpu.concatenate %13, %24, %13 in 0 : vector<1x64xf32>, vector<8x64xf32>, vector<1x64xf32> -> vector<10x64xf32>
    %27 = vector.extract_strided_slice %26 {offsets = [0, 0], sizes = [8, 64], strides = [1, 1]} : vector<10x64xf32> to vector<8x64xf32>
    %28 = vector.extract_strided_slice %26 {offsets = [1, 0], sizes = [8, 64], strides = [1, 1]} : vector<10x64xf32> to vector<8x64xf32>
    %29 = vector.extract_strided_slice %26 {offsets = [2, 0], sizes = [8, 64], strides = [1, 1]} : vector<10x64xf32> to vector<8x64xf32>
    %30 = tpu.concatenate %27, %28, %29 in 1 : vector<8x64xf32>, vector<8x64xf32>, vector<8x64xf32> -> vector<8x192xf32>
    %c0_13 = arith.constant 0 : index
    %c0_14 = arith.constant 0 : index
    %31 = vector.load %arg3[%c0_13, %c0_14] : memref<1088x64xf32, #tpu.memory_space<vmem>>, vector<192x64xf32>
    %cst_15 = arith.constant dense<0.000000e+00> : vector<8x64xf32>
    %32 = tpu.matmul %30, %31, %cst_15 {dimension_numbers = #tpu.dot_dimension_numbers<[1], [0], [0], [1], [0, 0, 1, 1], [], []>} : vector<8x192xf32>, vector<192x64xf32>, vector<8x64xf32> -> vector<8x64xf32>
    %c4 = arith.constant 4 : index
    %c0_16 = arith.constant 0 : index
    %33 = vector.load %arg4[%c4, %c0_16] : memref<11x128xf32, #tpu.memory_space<vmem>>, vector<1x64xf32>
    %34 = vector.broadcast %33 : vector<1x64xf32> to vector<8x64xf32>
    %35 = arith.addf %32, %34 : vector<8x64xf32>
    %cst_17 = arith.constant 0.000000e+00 : f32
    %36 = vector.broadcast %cst_17 : f32 to vector<8x64xf32>
    %37 = arith.maximumf %35, %36 : vector<8x64xf32>
    %38 = arith.addf %37, %25 : vector<8x64xf32>
    %cst_18 = arith.constant 0.000000e+00 : f32
    %39 = vector.broadcast %cst_18 : f32 to vector<8x64xf32>
    %40 = arith.maximumf %38, %39 : vector<8x64xf32>
    %41 = vector.extract_strided_slice %40 {offsets = [0, 0], sizes = [6, 64], strides = [1, 1]} : vector<8x64xf32> to vector<6x64xf32>
    %42 = vector.extract_strided_slice %40 {offsets = [1, 0], sizes = [6, 64], strides = [1, 1]} : vector<8x64xf32> to vector<6x64xf32>
    %43 = arith.addf %41, %42 : vector<6x64xf32>
    %44 = vector.extract_strided_slice %40 {offsets = [2, 0], sizes = [6, 64], strides = [1, 1]} : vector<8x64xf32> to vector<6x64xf32>
    %45 = arith.addf %43, %44 : vector<6x64xf32>
    %cst_19 = arith.constant 0.333333343 : f32
    %46 = vector.broadcast %cst_19 : f32 to vector<6x64xf32>
    %47 = arith.mulf %45, %46 : vector<6x64xf32>
    %48 = vector.extract_strided_slice %47 {offsets = [0, 0], sizes = [1, 64], strides = [1, 1]} : vector<6x64xf32> to vector<1x64xf32>
    %49 = vector.extract_strided_slice %47 {offsets = [1, 0], sizes = [1, 64], strides = [1, 1]} : vector<6x64xf32> to vector<1x64xf32>
    %50 = vector.extract_strided_slice %47 {offsets = [2, 0], sizes = [1, 64], strides = [1, 1]} : vector<6x64xf32> to vector<1x64xf32>
    %51 = vector.extract_strided_slice %47 {offsets = [3, 0], sizes = [1, 64], strides = [1, 1]} : vector<6x64xf32> to vector<1x64xf32>
    %52 = vector.extract_strided_slice %47 {offsets = [4, 0], sizes = [1, 64], strides = [1, 1]} : vector<6x64xf32> to vector<1x64xf32>
    %53 = vector.extract_strided_slice %47 {offsets = [5, 0], sizes = [1, 64], strides = [1, 1]} : vector<6x64xf32> to vector<1x64xf32>
    %54 = vector.extract_strided_slice %12 {offsets = [0, 0], sizes = [7, 128], strides = [1, 1]} : vector<9x128xf32> to vector<7x128xf32>
    %55 = vector.extract_strided_slice %9 {offsets = [0, 0], sizes = [7, 128], strides = [1, 1]} : vector<8x128xf32> to vector<7x128xf32>
    %56 = vector.extract_strided_slice %12 {offsets = [1, 0], sizes = [7, 128], strides = [1, 1]} : vector<9x128xf32> to vector<7x128xf32>
    %57 = vector.extract_strided_slice %9 {offsets = [1, 0], sizes = [7, 128], strides = [1, 1]} : vector<8x128xf32> to vector<7x128xf32>
    %58 = vector.extract_strided_slice %12 {offsets = [2, 0], sizes = [7, 128], strides = [1, 1]} : vector<9x128xf32> to vector<7x128xf32>
    %59 = tpu.concatenate %54, %55, %56, %57, %58 in 1 : vector<7x128xf32>, vector<7x128xf32>, vector<7x128xf32>, vector<7x128xf32>, vector<7x128xf32> -> vector<7x640xf32>
    %c416 = arith.constant 416 : index
    %c0_20 = arith.constant 0 : index
    %60 = vector.load %arg2[%c416, %c0_20] : memref<2656x128xf32, #tpu.memory_space<vmem>>, vector<640x128xf32>
    %cst_21 = arith.constant dense<0.000000e+00> : vector<7x128xf32>
    %61 = tpu.matmul %59, %60, %cst_21 {dimension_numbers = #tpu.dot_dimension_numbers<[1], [0], [0], [1], [0, 0, 1, 1], [], []>} : vector<7x640xf32>, vector<640x128xf32>, vector<7x128xf32> -> vector<7x128xf32>
    %c2 = arith.constant 2 : index
    %c0_22 = arith.constant 0 : index
    %62 = vector.load %arg4[%c2, %c0_22] : memref<11x128xf32, #tpu.memory_space<vmem>>, vector<1x128xf32>
    %63 = vector.broadcast %62 : vector<1x128xf32> to vector<7x128xf32>
    %64 = arith.addf %61, %63 : vector<7x128xf32>
    %cst_23 = arith.constant 0.000000e+00 : f32
    %65 = vector.broadcast %cst_23 : f32 to vector<7x128xf32>
    %66 = arith.maximumf %64, %65 : vector<7x128xf32>
    %67 = vector.extract_strided_slice %66 {offsets = [0, 0], sizes = [7, 64], strides = [1, 1]} : vector<7x128xf32> to vector<7x64xf32>
    %68 = vector.extract_strided_slice %66 {offsets = [0, 64], sizes = [7, 64], strides = [1, 1]} : vector<7x128xf32> to vector<7x64xf32>
    %69 = tpu.concatenate %13, %67, %13 in 0 : vector<1x64xf32>, vector<7x64xf32>, vector<1x64xf32> -> vector<9x64xf32>
    %70 = vector.extract_strided_slice %69 {offsets = [0, 0], sizes = [5, 64], strides = [1, 1]} : vector<9x64xf32> to vector<5x64xf32>
    %71 = vector.extract_strided_slice %69 {offsets = [1, 0], sizes = [5, 64], strides = [1, 1]} : vector<9x64xf32> to vector<5x64xf32>
    %72 = vector.extract_strided_slice %69 {offsets = [2, 0], sizes = [5, 64], strides = [1, 1]} : vector<9x64xf32> to vector<5x64xf32>
    %73 = vector.extract_strided_slice %69 {offsets = [3, 0], sizes = [5, 64], strides = [1, 1]} : vector<9x64xf32> to vector<5x64xf32>
    %74 = vector.extract_strided_slice %69 {offsets = [4, 0], sizes = [5, 64], strides = [1, 1]} : vector<9x64xf32> to vector<5x64xf32>
    %75 = tpu.concatenate %70, %71, %72, %73, %74 in 1 : vector<5x64xf32>, vector<5x64xf32>, vector<5x64xf32>, vector<5x64xf32>, vector<5x64xf32> -> vector<5x320xf32>
    %c192 = arith.constant 192 : index
    %c0_24 = arith.constant 0 : index
    %76 = vector.load %arg3[%c192, %c0_24] : memref<1088x64xf32, #tpu.memory_space<vmem>>, vector<320x64xf32>
    %cst_25 = arith.constant dense<0.000000e+00> : vector<5x64xf32>
    %77 = tpu.matmul %75, %76, %cst_25 {dimension_numbers = #tpu.dot_dimension_numbers<[1], [0], [0], [1], [0, 0, 1, 1], [], []>} : vector<5x320xf32>, vector<320x64xf32>, vector<5x64xf32> -> vector<5x64xf32>
    %c5 = arith.constant 5 : index
    %c0_26 = arith.constant 0 : index
    %78 = vector.load %arg4[%c5, %c0_26] : memref<11x128xf32, #tpu.memory_space<vmem>>, vector<1x64xf32>
    %79 = vector.broadcast %78 : vector<1x64xf32> to vector<5x64xf32>
    %80 = arith.addf %77, %79 : vector<5x64xf32>
    %cst_27 = arith.constant 0.000000e+00 : f32
    %81 = vector.broadcast %cst_27 : f32 to vector<5x64xf32>
    %82 = arith.maximumf %80, %81 : vector<5x64xf32>
    %83 = vector.extract_strided_slice %68 {offsets = [0, 0], sizes = [5, 64], strides = [1, 1]} : vector<7x64xf32> to vector<5x64xf32>
    %84 = arith.addf %82, %83 : vector<5x64xf32>
    %cst_28 = arith.constant 0.000000e+00 : f32
    %85 = vector.broadcast %cst_28 : f32 to vector<5x64xf32>
    %86 = arith.maximumf %84, %85 : vector<5x64xf32>
    %87 = vector.extract_strided_slice %86 {offsets = [0, 0], sizes = [3, 64], strides = [1, 1]} : vector<5x64xf32> to vector<3x64xf32>
    %88 = vector.extract_strided_slice %86 {offsets = [1, 0], sizes = [3, 64], strides = [1, 1]} : vector<5x64xf32> to vector<3x64xf32>
    %89 = arith.addf %87, %88 : vector<3x64xf32>
    %90 = vector.extract_strided_slice %86 {offsets = [2, 0], sizes = [3, 64], strides = [1, 1]} : vector<5x64xf32> to vector<3x64xf32>
    %91 = arith.addf %89, %90 : vector<3x64xf32>
    %cst_29 = arith.constant 0.333333343 : f32
    %92 = vector.broadcast %cst_29 : f32 to vector<3x64xf32>
    %93 = arith.mulf %91, %92 : vector<3x64xf32>
    %94 = vector.extract_strided_slice %93 {offsets = [0, 0], sizes = [1, 64], strides = [1, 1]} : vector<3x64xf32> to vector<1x64xf32>
    %95 = vector.extract_strided_slice %93 {offsets = [1, 0], sizes = [1, 64], strides = [1, 1]} : vector<3x64xf32> to vector<1x64xf32>
    %96 = vector.extract_strided_slice %93 {offsets = [2, 0], sizes = [1, 64], strides = [1, 1]} : vector<3x64xf32> to vector<1x64xf32>
    %97 = vector.extract_strided_slice %12 {offsets = [0, 0], sizes = [6, 128], strides = [1, 1]} : vector<9x128xf32> to vector<6x128xf32>
    %98 = vector.extract_strided_slice %9 {offsets = [0, 0], sizes = [6, 128], strides = [1, 1]} : vector<8x128xf32> to vector<6x128xf32>
    %99 = vector.extract_strided_slice %12 {offsets = [1, 0], sizes = [6, 128], strides = [1, 1]} : vector<9x128xf32> to vector<6x128xf32>
    %100 = vector.extract_strided_slice %9 {offsets = [1, 0], sizes = [6, 128], strides = [1, 1]} : vector<8x128xf32> to vector<6x128xf32>
    %101 = vector.extract_strided_slice %12 {offsets = [2, 0], sizes = [6, 128], strides = [1, 1]} : vector<9x128xf32> to vector<6x128xf32>
    %102 = vector.extract_strided_slice %9 {offsets = [2, 0], sizes = [6, 128], strides = [1, 1]} : vector<8x128xf32> to vector<6x128xf32>
    %103 = vector.extract_strided_slice %12 {offsets = [3, 0], sizes = [6, 128], strides = [1, 1]} : vector<9x128xf32> to vector<6x128xf32>
    %104 = tpu.concatenate %97, %98, %99, %100, %101, %102, %103 in 1 : vector<6x128xf32>, vector<6x128xf32>, vector<6x128xf32>, vector<6x128xf32>, vector<6x128xf32>, vector<6x128xf32>, vector<6x128xf32> -> vector<6x896xf32>
    %c1056 = arith.constant 1056 : index
    %c0_30 = arith.constant 0 : index
    %105 = vector.load %arg2[%c1056, %c0_30] : memref<2656x128xf32, #tpu.memory_space<vmem>>, vector<896x128xf32>
    %cst_31 = arith.constant dense<0.000000e+00> : vector<6x128xf32>
    %106 = tpu.matmul %104, %105, %cst_31 {dimension_numbers = #tpu.dot_dimension_numbers<[1], [0], [0], [1], [0, 0, 1, 1], [], []>} : vector<6x896xf32>, vector<896x128xf32>, vector<6x128xf32> -> vector<6x128xf32>
    %c3 = arith.constant 3 : index
    %c0_32 = arith.constant 0 : index
    %107 = vector.load %arg4[%c3, %c0_32] : memref<11x128xf32, #tpu.memory_space<vmem>>, vector<1x128xf32>
    %108 = vector.broadcast %107 : vector<1x128xf32> to vector<6x128xf32>
    %109 = arith.addf %106, %108 : vector<6x128xf32>
    %cst_33 = arith.constant 0.000000e+00 : f32
    %110 = vector.broadcast %cst_33 : f32 to vector<6x128xf32>
    %111 = arith.maximumf %109, %110 : vector<6x128xf32>
    %112 = vector.extract_strided_slice %111 {offsets = [0, 0], sizes = [6, 64], strides = [1, 1]} : vector<6x128xf32> to vector<6x64xf32>
    %113 = vector.extract_strided_slice %111 {offsets = [0, 64], sizes = [6, 64], strides = [1, 1]} : vector<6x128xf32> to vector<6x64xf32>
    %114 = tpu.concatenate %13, %112, %13 in 0 : vector<1x64xf32>, vector<6x64xf32>, vector<1x64xf32> -> vector<8x64xf32>
    %115 = vector.extract_strided_slice %114 {offsets = [0, 0], sizes = [2, 64], strides = [1, 1]} : vector<8x64xf32> to vector<2x64xf32>
    %116 = vector.extract_strided_slice %114 {offsets = [1, 0], sizes = [2, 64], strides = [1, 1]} : vector<8x64xf32> to vector<2x64xf32>
    %117 = vector.extract_strided_slice %114 {offsets = [2, 0], sizes = [2, 64], strides = [1, 1]} : vector<8x64xf32> to vector<2x64xf32>
    %118 = vector.extract_strided_slice %114 {offsets = [3, 0], sizes = [2, 64], strides = [1, 1]} : vector<8x64xf32> to vector<2x64xf32>
    %119 = vector.extract_strided_slice %114 {offsets = [4, 0], sizes = [2, 64], strides = [1, 1]} : vector<8x64xf32> to vector<2x64xf32>
    %120 = vector.extract_strided_slice %114 {offsets = [5, 0], sizes = [2, 64], strides = [1, 1]} : vector<8x64xf32> to vector<2x64xf32>
    %121 = vector.extract_strided_slice %114 {offsets = [6, 0], sizes = [2, 64], strides = [1, 1]} : vector<8x64xf32> to vector<2x64xf32>
    %122 = tpu.concatenate %115, %116, %117, %118, %119, %120, %121 in 1 : vector<2x64xf32>, vector<2x64xf32>, vector<2x64xf32>, vector<2x64xf32>, vector<2x64xf32>, vector<2x64xf32>, vector<2x64xf32> -> vector<2x448xf32>
    %c512 = arith.constant 512 : index
    %c0_34 = arith.constant 0 : index
    %123 = vector.load %arg3[%c512, %c0_34] : memref<1088x64xf32, #tpu.memory_space<vmem>>, vector<448x64xf32>
    %cst_35 = arith.constant dense<0.000000e+00> : vector<2x64xf32>
    %124 = tpu.matmul %122, %123, %cst_35 {dimension_numbers = #tpu.dot_dimension_numbers<[1], [0], [0], [1], [0, 0, 1, 1], [], []>} : vector<2x448xf32>, vector<448x64xf32>, vector<2x64xf32> -> vector<2x64xf32>
    %c6 = arith.constant 6 : index
    %c0_36 = arith.constant 0 : index
    %125 = vector.load %arg4[%c6, %c0_36] : memref<11x128xf32, #tpu.memory_space<vmem>>, vector<1x64xf32>
    %126 = vector.broadcast %125 : vector<1x64xf32> to vector<2x64xf32>
    %127 = arith.addf %124, %126 : vector<2x64xf32>
    %cst_37 = arith.constant 0.000000e+00 : f32
    %128 = vector.broadcast %cst_37 : f32 to vector<2x64xf32>
    %129 = arith.maximumf %127, %128 : vector<2x64xf32>
    %130 = vector.extract_strided_slice %113 {offsets = [0, 0], sizes = [2, 64], strides = [1, 1]} : vector<6x64xf32> to vector<2x64xf32>
    %131 = arith.addf %129, %130 : vector<2x64xf32>
    %cst_38 = arith.constant 0.000000e+00 : f32
    %132 = vector.broadcast %cst_38 : f32 to vector<2x64xf32>
    %133 = arith.maximumf %131, %132 : vector<2x64xf32>
    %134 = vector.extract_strided_slice %133 {offsets = [0, 0], sizes = [1, 64], strides = [1, 1]} : vector<2x64xf32> to vector<1x64xf32>
    %135 = vector.extract_strided_slice %133 {offsets = [1, 0], sizes = [1, 64], strides = [1, 1]} : vector<2x64xf32> to vector<1x64xf32>
    %136 = tpu.concatenate %48, %49, %50, %51, %52, %53, %94, %95, %96, %134, %135 in 1 : vector<1x64xf32>, vector<1x64xf32>, vector<1x64xf32>, vector<1x64xf32>, vector<1x64xf32>, vector<1x64xf32>, vector<1x64xf32>, vector<1x64xf32>, vector<1x64xf32>, vector<1x64xf32>, vector<1x64xf32> -> vector<1x704xf32>
    %c1952 = arith.constant 1952 : index
    %c0_39 = arith.constant 0 : index
    %137 = vector.load %arg2[%c1952, %c0_39] : memref<2656x128xf32, #tpu.memory_space<vmem>>, vector<704x128xf32>
    %cst_40 = arith.constant dense<0.000000e+00> : vector<1x128xf32>
    %138 = tpu.matmul %136, %137, %cst_40 {dimension_numbers = #tpu.dot_dimension_numbers<[1], [0], [0], [1], [0, 0, 1, 1], [], []>} : vector<1x704xf32>, vector<704x128xf32>, vector<1x128xf32> -> vector<1x128xf32>
    %c7 = arith.constant 7 : index
    %c0_41 = arith.constant 0 : index
    %139 = vector.load %arg4[%c7, %c0_41] : memref<11x128xf32, #tpu.memory_space<vmem>>, vector<1x128xf32>
    %140 = arith.addf %138, %139 : vector<1x128xf32>
    %cst_42 = arith.constant 0.000000e+00 : f32
    %141 = vector.broadcast %cst_42 : f32 to vector<1x128xf32>
    %142 = arith.maximumf %140, %141 : vector<1x128xf32>
    %c960 = arith.constant 960 : index
    %c0_43 = arith.constant 0 : index
    %143 = vector.load %arg3[%c960, %c0_43] : memref<1088x64xf32, #tpu.memory_space<vmem>>, vector<128x32xf32>
    %cst_44 = arith.constant dense<0.000000e+00> : vector<1x32xf32>
    %144 = tpu.matmul %142, %143, %cst_44 {dimension_numbers = #tpu.dot_dimension_numbers<[1], [0], [0], [1], [0, 0, 1, 1], [], []>} : vector<1x128xf32>, vector<128x32xf32>, vector<1x32xf32> -> vector<1x32xf32>
    %c8 = arith.constant 8 : index
    %c0_45 = arith.constant 0 : index
    %145 = vector.load %arg4[%c8, %c0_45] : memref<11x128xf32, #tpu.memory_space<vmem>>, vector<1x32xf32>
    %146 = arith.addf %144, %145 : vector<1x32xf32>
    %cst_46 = arith.constant 0.000000e+00 : f32
    %147 = vector.broadcast %cst_46 : f32 to vector<1x32xf32>
    %148 = arith.maximumf %146, %147 : vector<1x32xf32>
    %c9 = arith.constant 9 : index
    %c0_47 = arith.constant 0 : index
    %149 = vector.load %arg4[%c9, %c0_47] : memref<11x128xf32, #tpu.memory_space<vmem>>, vector<1x32xf32>
    %150 = arith.mulf %148, %149 : vector<1x32xf32>
    %cst_48 = arith.constant dense<0.000000e+00> : vector<1xf32>
    %151 = vector.multi_reduction <add>, %150, %cst_48 [1] : vector<1x32xf32> to vector<1xf32>
    %152 = vector.shape_cast %151 : vector<1xf32> to vector<1x1xf32>
    %c10 = arith.constant 10 : index
    %c0_49 = arith.constant 0 : index
    %153 = vector.load %arg4[%c10, %c0_49] : memref<11x128xf32, #tpu.memory_space<vmem>>, vector<1x1xf32>
    %154 = arith.addf %152, %153 : vector<1x1xf32>
    %155 = vector.shape_cast %154 : vector<1x1xf32> to vector<1x1xf32>
    %156 = vector.broadcast %155 : vector<1x1xf32> to vector<1x128xf32>
    %c0_50 = arith.constant 0 : index
    %c0_51 = arith.constant 0 : index
    %c0_52 = arith.constant 0 : index
    %157 = vector.load %arg5[%c0_50, %c0_51, %c0_52] : memref<1x1x128xf32, #tpu.memory_space<vmem>>, vector<1x1x128xf32>
    %158 = vector.shape_cast %157 : vector<1x1x128xf32> to vector<1x128xf32>
    %159 = vector.shape_cast %156 : vector<1x128xf32> to vector<1x1x128xf32>
    tpu.vector_store %arg5[%c0_50, %c0_51, %c0_52], %159 {strides = array<i32>} : memref<1x1x128xf32, #tpu.memory_space<vmem>>, vector<1x1x128xf32>,
    return
  }
  func.func @transform_0(%arg0: i32) -> (i32, i32, i32) {
    %c0_i32 = arith.constant 0 : i32
    %c0_i32_0 = arith.constant 0 : i32
    %c0_i32_1 = arith.constant 0 : i32
    return %arg0, %c0_i32, %c0_i32_0 : i32, i32, i32
  }
  func.func @transform_1(%arg0: i32) -> (i32, i32) {
    %c0_i32 = arith.constant 0 : i32
    %c0_i32_0 = arith.constant 0 : i32
    %c0_i32_1 = arith.constant 0 : i32
    return %c0_i32, %c0_i32_0 : i32, i32
  }
  func.func @transform_2(%arg0: i32) -> (i32, i32) {
    %c0_i32 = arith.constant 0 : i32
    %c0_i32_0 = arith.constant 0 : i32
    %c0_i32_1 = arith.constant 0 : i32
    return %c0_i32, %c0_i32_0 : i32, i32
  }
  func.func @transform_3(%arg0: i32) -> (i32, i32) {
    %c0_i32 = arith.constant 0 : i32
    %c0_i32_0 = arith.constant 0 : i32
    %c0_i32_1 = arith.constant 0 : i32
    return %c0_i32, %c0_i32_0 : i32, i32
  }
  func.func @transform_4(%arg0: i32) -> (i32, i32, i32) {
    %c0_i32 = arith.constant 0 : i32
    %c0_i32_0 = arith.constant 0 : i32
    %c0_i32_1 = arith.constant 0 : i32
    return %arg0, %c0_i32, %c0_i32_0 : i32, i32, i32
  }
}

</mosaic_0001>

<llo_original>
// kernel: _lambda_.1
$region0: #{_lambda_.1}
  #allocation0 [shape = 'u32[]', space=smem, size = 0x4, offset = 0x4, fixed_abs, tag = 'smem constant byte address 0x4 - core index']
  #allocation1 [shape = 'u32[144,128]{1,0:T(1,128)}', space=vmem, size = 0x12000, scoped, tag = 'internal scratch']
  %s0 = inlined_call_operand.vmem [shape: f32[2,16,32], index: 0, kind: input, shape index: {}]
  %s1 = inlined_call_operand.hbm [shape: f32[2656,128], index: 1, kind: input, shape index: {}]
  %s2 = inlined_call_operand.hbm [shape: f32[1088,64], index: 2, kind: input, shape index: {}]
  %s3 = inlined_call_operand.hbm [shape: f32[11,128], index: 3, kind: input, shape index: {}]
  %s4 = inlined_call_operand.vmem [shape: f32[2,1,128], index: 4, kind: output, shape index: {}]
  %s5 = sld [smem:[#allocation0]]
  $region61: #{_lambda_.1} parent=0
    _
  %s7 = ssub.s32 1, %s5
  %s8 = scalar_select 0, %s7, %s5
  $region1: #{_lambda_.1} parent=0
    #allocation2 [shape = 'u8[1359872]{0}', space=vmem, size = 0x14c000, scoped, tag = 'input window, operand 1, single buffered']
    #allocation3 [shape = 's32[2]{0}', space=sflag, size = 0x8, scoped, tag = 'scoped memory for _lambda_.1']
    #allocation4 [shape = 'u8[557056]{0}', space=vmem, size = 0x88000, scoped, tag = 'input window, operand 2, single buffered']
    #allocation5 [shape = 's32[1]{0}', space=sflag, size = 0x4, scoped, tag = 'scoped memory for _lambda_.1']
    #allocation6 [shape = 'u8[8192]{0}', space=vmem, size = 0x2000, scoped, tag = 'input window, operand 3, single buffered']
    %9 = vsyncpa [#allocation3], 0
    %10 = vsyncpa [#allocation5], 0
    loop: start=0, step=1, limit=4
    $region2: #{_lambda_.1} parent=1 // loop_pre_header
      _
    $region3: #{_lambda_.1} parent=1 // loop_header
      %s12 = sphi 0, %s16
      %p13 = scmp.ge.s32.totalorder %s12, 4
      %s22 = sphi 0, %s24
      %s25 = sphi 0, %s22
      %s26 = sphi 0, %s25
      %s42 = sphi 0, %s26
      %s46 = sphi 0, %s46
      %s48 = sphi 0, %s46
      %s49 = sphi 0, %s48
      %s63 = sphi 0, %s49
      %s67 = sphi 0, %s67
      %s69 = sphi 0, %s67
      %s70 = sphi 0, %s69
      %s84 = sphi 0, %s70
      %s88 = sphi 0, %s88
      %s90 = sphi 0, %s88
      %s91 = sphi 0, %s90
      %s105 = sphi 0, %s91
      %s111 = sphi 0, %s113
      %s114 = sphi 0, %s111
      %s115 = sphi 0, %s114
      %s131 = sphi 0, %s115
    $region4: #{_lambda_.1} parent=1 // loop_header_branch
      %15 = sbr.rel (%p13) target = $region8
    $region5: #{_lambda_.1} parent=1 // loop_body
      %s17 = ssub.s32 %s12, 1
      %s18 = ssub.s32 %s12, 2
      %s19 = sadd.s32 %s12, 1
      %s20 = ssub.s32 %s12, %s19
      %p21 = scmp.eq.s32.totalorder %s20, 0
      %s23 = sadd.s32 %s22, 1
      %s24 = scalar_select %p21, %s22, %s23
      %p27 = pneg %p21
      %p28 = scmp.eq.s32.totalorder %s12, 1
      %p29 = por %p27, %p28
      %p30 = scmp.ne.s32.totalorder %s22, %s25
      %p31 = scmp.eq.s32.totalorder %s12, 0
      %p32 = por %p30, %p31
      %p33 = scmp.ne.s32.totalorder %s22, %s25
      %p34 = scmp.eq.s32.totalorder %s17, 1
      %p35 = por %p33, %p34
      %p36 = scmp.ne.s32.totalorder %s25, %s26
      %p37 = scmp.eq.s32.totalorder %s17, 0
      %p38 = por %p36, %p37
      %p39 = scmp.ne.s32.totalorder %s25, %s26
      %p40 = scmp.eq.s32.totalorder %s18, 1
      %p41 = por %p39, %p40
      %p43 = scmp.ne.s32.totalorder %s26, %s42
      %p44 = scmp.eq.s32.totalorder %s18, 0
      %p45 = por %p43, %p44
      %s47 = sadd.s32 %s46, 1
      %p50 = scmp.eq.s32.totalorder %s12, 1
      %p51 = scmp.ne.s32.totalorder %s46, %s48
      %p52 = scmp.eq.s32.totalorder %s12, 0
      %p53 = por %p51, %p52
      %p54 = scmp.ne.s32.totalorder %s46, %s48
      %p55 = scmp.eq.s32.totalorder %s17, 1
      %p56 = por %p54, %p55
      %p57 = scmp.ne.s32.totalorder %s48, %s49
      %p58 = scmp.eq.s32.totalorder %s17, 0
      %p59 = por %p57, %p58
      %p60 = scmp.ne.s32.totalorder %s48, %s49
      %p61 = scmp.eq.s32.totalorder %s18, 1
      %p62 = por %p60, %p61
      %p64 = scmp.ne.s32.totalorder %s49, %s63
      %p65 = scmp.eq.s32.totalorder %s18, 0
      %p66 = por %p64, %p65
      %s68 = sadd.s32 %s67, 1
      %p71 = scmp.eq.s32.totalorder %s12, 1
      %p72 = scmp.ne.s32.totalorder %s67, %s69
      %p73 = scmp.eq.s32.totalorder %s12, 0
      %p74 = por %p72, %p73
      %p75 = scmp.ne.s32.totalorder %s67, %s69
      %p76 = scmp.eq.s32.totalorder %s17, 1
      %p77 = por %p75, %p76
      %p78 = scmp.ne.s32.totalorder %s69, %s70
      %p79 = scmp.eq.s32.totalorder %s17, 0
      %p80 = por %p78, %p79
      %p81 = scmp.ne.s32.totalorder %s69, %s70
      %p82 = scmp.eq.s32.totalorder %s18, 1
      %p83 = por %p81, %p82
      %p85 = scmp.ne.s32.totalorder %s70, %s84
      %p86 = scmp.eq.s32.totalorder %s18, 0
      %p87 = por %p85, %p86
      %s89 = sadd.s32 %s88, 1
      %p92 = scmp.eq.s32.totalorder %s12, 1
      %p93 = scmp.ne.s32.totalorder %s88, %s90
      %p94 = scmp.eq.s32.totalorder %s12, 0
      %p95 = por %p93, %p94
      %p96 = scmp.ne.s32.totalorder %s88, %s90
      %p97 = scmp.eq.s32.totalorder %s17, 1
      %p98 = por %p96, %p97
      %p99 = scmp.ne.s32.totalorder %s90, %s91
      %p100 = scmp.eq.s32.totalorder %s17, 0
      %p101 = por %p99, %p100
      %p102 = scmp.ne.s32.totalorder %s90, %s91
      %p103 = scmp.eq.s32.totalorder %s18, 1
      %p104 = por %p102, %p103
      %p106 = scmp.ne.s32.totalorder %s91, %s105
      %p107 = scmp.eq.s32.totalorder %s18, 0
      %p108 = por %p106, %p107
      %s109 = ssub.s32 %s12, %s19
      %p110 = scmp.eq.s32.totalorder %s109, 0
      %s112 = sadd.s32 %s111, 1
      %s113 = scalar_select %p110, %s111, %s112
      %p116 = pneg %p110
      %p117 = scmp.eq.s32.totalorder %s12, 1
      %p118 = por %p116, %p117
      %p119 = scmp.ne.s32.totalorder %s111, %s114
      %p120 = scmp.eq.s32.totalorder %s12, 0
      %p121 = por %p119, %p120
      %p122 = scmp.ne.s32.totalorder %s111, %s114
      %p123 = scmp.eq.s32.totalorder %s17, 1
      %p124 = por %p122, %p123
      %p125 = scmp.ne.s32.totalorder %s114, %s115
      %p126 = scmp.eq.s32.totalorder %s17, 0
      %p127 = por %p125, %p126
      %p128 = scmp.ne.s32.totalorder %s114, %s115
      %p129 = scmp.eq.s32.totalorder %s18, 1
      %p130 = por %p128, %p129
      %p132 = scmp.ne.s32.totalorder %s115, %s131
      %p133 = scmp.eq.s32.totalorder %s18, 0
      %p134 = por %p132, %p133
      %p135 = scmp.le.s32.totalorder 1, %s12
      %p136 = scmp.lt.s32.totalorder %s12, 3
      %p137 = pnand %p135, %p136
      %p138 = pneg %p137
      // Predicated region
      $region9: #{_lambda_.1} parent=5 // pred_check
        _
      $region10: #{_lambda_.1} parent=5 // pred_check_branch
        %140 = sbr.rel (%p137) target = $region12
      $region11: #{_lambda_.1} parent=5 // pred_region
        %s141 = ssub.s32 %s12, 1
        // Predicated region
        $region13: #{_lambda_.1} parent=11 // pred_check
          %p142 = pneg %p59
        $region14: #{_lambda_.1} parent=11 // pred_check_branch
          %144 = sbr.rel (%p142) target = $region16
        $region15: #{_lambda_.1} parent=11 // pred_region
          %s146 = ssub.s32 42496, 42496
          %147 = vsyncadd [#allocation3], %s146
          %s148 = sshll.u32 [#allocation2], 4
          %s149 = int_to_ptr.vmem [resolvable:$true] %s148
          %154 = dma.hbm_to_vmem [thread:$0]  %s1, 42496, %s149, [#allocation3], 128, 128, 8
        $region16: #{_lambda_.1} parent=11 // pred_fallthru
          _
        // Predicated region
        $region17: #{_lambda_.1} parent=11 // pred_check
          %p155 = pneg %p80
        $region18: #{_lambda_.1} parent=11 // pred_check_branch
          %157 = sbr.rel (%p155) target = $region20
        $region19: #{_lambda_.1} parent=11 // pred_region
          %s159 = ssub.s32 17408, 17408
          %160 = vsyncadd [#allocation5], %s159
          %s161 = sshll.u32 [#allocation4], 4
          %s162 = int_to_ptr.vmem [resolvable:$true] %s161
          %167 = dma.hbm_to_vmem [thread:$0]  %s2, 17408, %s162, [#allocation5], 128, 128, 8
        $region20: #{_lambda_.1} parent=11 // pred_fallthru
          _
        // Predicated region
        $region21: #{_lambda_.1} parent=11 // pred_check
          %p168 = pneg %p101
        $region22: #{_lambda_.1} parent=11 // pred_check_branch
          %170 = sbr.rel (%p168) target = $region24
        $region23: #{_lambda_.1} parent=11 // pred_region
          %s172 = ssub.s32 256, 256
          %173 = vsyncadd [#allocation5], %s172
          %s174 = sshll.u32 [#allocation6], 4
          %s175 = int_to_ptr.vmem [resolvable:$true] %s174
          %180 = dma.hbm_to_vmem [thread:$0]  %s3, 256, %s175, [#allocation5], 128, 128, 8
        $region24: #{_lambda_.1} parent=11 // pred_fallthru
          _
      $region12: #{_lambda_.1} parent=5 // pred_fallthru
        _
      %p181 = scmp.lt.s32.totalorder %s12, 2
      // Predicated region
      $region25: #{_lambda_.1} parent=5 // pred_check
        %p182 = pneg %p181
      $region26: #{_lambda_.1} parent=5 // pred_check_branch
        %184 = sbr.rel (%p182) target = $region28
      $region27: #{_lambda_.1} parent=5 // pred_region
        // Predicated region
        $region29: #{_lambda_.1} parent=27 // pred_check
          %p185 = pneg %p32
        $region30: #{_lambda_.1} parent=27 // pred_check_branch
          %187 = sbr.rel (%p185) target = $region32
        $region31: #{_lambda_.1} parent=27 // pred_region
          %p188 = scmp.lt.s32.totalorder %s12, 1
          %s189 = scalar_select %p188, %s12, 1
          %s190 = smul.addr %s189, 2
          %s191 = smul.addr %s190, 8
          %s192 = scalar_lea.vmem %s0, %s191
        $region32: #{_lambda_.1} parent=27 // pred_fallthru
          _
      $region28: #{_lambda_.1} parent=5 // pred_fallthru
        _
      %p193 = scmp.le.s32.totalorder 1, %s12
      %p194 = scmp.lt.s32.totalorder %s12, 3
      %p195 = pnand %p193, %p194
      %p196 = pneg %p195
      // Predicated region
      $region33: #{_lambda_.1} parent=5 // pred_check
        _
      $region34: #{_lambda_.1} parent=5 // pred_check_branch
        %198 = sbr.rel (%p195) target = $region36
      $region35: #{_lambda_.1} parent=5 // pred_region
        %s199 = ssub.s32 %s12, 1
        // Predicated region
        $region37: #{_lambda_.1} parent=35 // pred_check
          %p200 = pneg %p59
        $region38: #{_lambda_.1} parent=35 // pred_check_branch
          %202 = sbr.rel (%p200) target = $region40
        $region39: #{_lambda_.1} parent=35 // pred_region
          %203 = dma.done [#allocation3], 42496
        $region40: #{_lambda_.1} parent=35 // pred_fallthru
          _
        // Predicated region
        $region41: #{_lambda_.1} parent=35 // pred_check
          %p204 = pneg %p80
        $region42: #{_lambda_.1} parent=35 // pred_check_branch
          %206 = sbr.rel (%p204) target = $region44
        $region43: #{_lambda_.1} parent=35 // pred_region
          %207 = dma.done [#allocation5], 17408
        $region44: #{_lambda_.1} parent=35 // pred_fallthru
          _
        // Predicated region
        $region45: #{_lambda_.1} parent=35 // pred_check
          %p208 = pneg %p101
        $region46: #{_lambda_.1} parent=35 // pred_check_branch
          %210 = sbr.rel (%p208) target = $region48
        $region47: #{_lambda_.1} parent=35 // pred_region
          %211 = dma.done [#allocation5], 256
        $region48: #{_lambda_.1} parent=35 // pred_fallthru
          _
        %p212 = scmp.lt.s32.totalorder %s17, 1
        %s213 = scalar_select %p212, %s17, 1
        %s214 = smul.addr %s213, 2
        %s215 = smul.addr %s214, 8
        %s216 = scalar_lea.vmem %s0, %s215
        %p217 = pneg %p38
        %p218 = pneg %p35
        %p219 = pneg %p59
        %p220 = pneg %p56
        %p221 = pneg %p80
        %p222 = pneg %p77
        %p223 = pneg %p101
        %p224 = pneg %p98
        %p225 = pneg %p127
        %p226 = pneg %p124
        %p227 = scmp.lt.s32.totalorder %s17, 1
        %s228 = scalar_select %p227, %s17, 1
        %s229 = scalar_lea.vmem %s4, %s228
        %p230 = scmp.lt.s32.totalorder %s17, 1
        %s231 = scalar_select %p230, %s17, 1
        %s232 = smul.addr %s231, 2
        %s233 = smul.addr %s232, 8
        %s234 = scalar_lea.vmem %s0, %s233
        %p235 = scmp.lt.s32.totalorder %s17, 1
        %s236 = scalar_select %p235, %s17, 1
        %s237 = scalar_lea.vmem %s4, %s236
        %v238 = vld [vmem:[%s234] sm:$0xff]
        %v239 = vld [vmem:[%s234 + $0x8] sm:$0xff]
        %v240 = vld [vmem:[#allocation2] sm:$0xff]
        %v241 = vld [vmem:[#allocation2 + $0x8] sm:$0xff]
        %v242 = vld [vmem:[#allocation2 + $0x10] sm:$0xff]
        %v243 = vld [vmem:[#allocation2 + $0x18] sm:$0xff]
        %v244 = vld [vmem:[#allocation6] sm:$0x1]
        %v245 = vlaneseq
        %v246 = vshrl.u32 %v245, 7
        %v247 = vsub.s32 0, %v246
        %v248 = vrot.slane %v244, %v247
        %vm249 = vcmask 261120
        %v251 = vsel %vm249, %v238, 0
        %v254 = vsel %vm249, %v239, 0
        %256 = vmatprep.subr.mxu0 0.0
        %257 = vmatpush1.msra.mxu0 %v240
        %258 = vmatprep.subr.mxu0 0.0
        %259 = vmatpush1.msra.mxu0 %v241
        %260 = vmatprep.subr.mxu0 0.0
        %261 = vmatpush1.msra.mxu0 %v242
        %262 = vmatprep.subr.mxu0 0.0
        %263 = vmatpush1.msra.mxu0 %v243
        %264 = vmatprep.subr.mxu0 0.0
        %265 = vmatpush1.msra.mxu0 0.0
        %266 = vmatprep.subr.mxu0 0.0
        %267 = vmatpush1.msra.mxu0 0.0
        %268 = vmatprep.subr.mxu0 0.0
        %269 = vmatpush1.msra.mxu0 0.0
        %270 = vmatprep.subr.mxu0 0.0
        %271 = vmatpush1.msra.mxu0 0.0
        %272 = vmatprep.subr.mxu0 0.0
        %273 = vmatpush1.msra.mxu0 0.0
        %274 = vmatprep.subr.mxu0 0.0
        %275 = vmatpush1.msra.mxu0 0.0
        %276 = vmatprep.subr.mxu0 0.0
        %277 = vmatpush1.msra.mxu0 0.0
        %278 = vmatprep.subr.mxu0 0.0
        %279 = vmatpush1.msra.mxu0 0.0
        %280 = vmatprep.subr.mxu0 0.0
        %281 = vmatpush1.msra.mxu0 0.0
        %282 = vmatprep.subr.mxu0 0.0
        %283 = vmatpush1.msra.mxu0 0.0
        %284 = vmatprep.subr.mxu0 0.0
        %285 = vmatpush1.msra.mxu0 0.0
        %286 = vmatprep.subr.mxu0 0.0
        %287 = vmatpush1.msra.mxu0 0.0
        %288 = vmatprep.subr.mxu0 0.0
        %289 = vmatpush1.msra.mxu0 0.0
        %290 = vmatprep.subr.mxu0 0.0
        %291 = vmatpush1.msra.mxu0 0.0
        %292 = vmatprep.subr.mxu0 0.0
        %293 = vmatpush1.msra.mxu0 0.0
        %294 = vmatprep.subr.mxu0 0.0
        %295 = vmatpush1.msra.mxu0 0.0
        %296 = vmatprep.subr.mxu0 0.0
        %297 = vmatpush1.msra.mxu0 0.0
        %298 = vmatprep.subr.mxu0 0.0
        %299 = vmatpush1.msra.mxu0 0.0
        %300 = vmatprep.subr.mxu0 0.0
        %301 = vmatpush1.msra.mxu0 0.0
        %302 = vmatprep.subr.mxu0 0.0
        %303 = vmatpush1.msra.mxu0 0.0
        %304 = vmatprep.subr.mxu0 0.0
        %305 = vmatpush1.msra.mxu0 0.0
        %306 = vmatprep.subr.mxu0 0.0
        %307 = vmatpush1.msra.mxu0 0.0
        %308 = vmatprep.subr.mxu0 0.0
        %309 = vmatpush1.msra.mxu0 0.0
        %310 = vmatprep.subr.mxu0 0.0
        %311 = vmatpush1.msra.mxu0 0.0
        %312 = vmatprep.subr.mxu0 0.0
        %313 = vmatpush1.msra.mxu0 0.0
        %314 = vmatprep.subr.mxu0 0.0
        %315 = vmatpush1.msra.mxu0 0.0
        %316 = vmatprep.subr.mxu0 0.0
        %317 = vmatpush1.msra.mxu0 0.0
        %318 = vmatprep.subr.mxu0 0.0
        %319 = vmatpush1.msra.mxu0 0.0
        %320 = vmatprep.mubr.f32.mxu0 0.0
        %321 = vmatmul.mubr.f32.gmra.mrb[0].mxu0 %v251
        %v322 = vpop.f32.mrb[0].mxu0
        %v323 = vadd.f32 %v248, %v322
        %v324 = vpop.f32.mrb[0].mxu0
        %325 = vmatprep.mubr.f32.mxu0 0.0
        %326 = vmatmul.mubr.f32.gmra.mrb[0].mxu0 %v254
        %v327 = vpop.f32.mrb[0].mxu0
        %v328 = vadd.f32 %v248, %v327
        %v329 = vpop.f32.mrb[0].mxu0
        %330 = vdwg.mxu0
        %v331 = vmax.f32 %v323, 0.0
        %v332 = vmax.f32 %v328, 0.0
        %v334 = vrot.slane %v332, 7
        %vm336 = vcmask 1040384
        %v337 = vsel %vm336, 0.0, %v334
        %vm340 = vcmask 1046528
        %v341 = vrot.slane %v337, 1
        %v342 = vrot.slane 0.0, 1
        %v343 = vsel %vm340, %v341, %v342
        %v345 = vld [vmem:[#allocation2 + $0x20] sm:$0xff]
        %v346 = vld [vmem:[#allocation2 + $0x28] sm:$0xff]
        %v347 = vld [vmem:[#allocation2 + $0x30] sm:$0xff]
        %v348 = vld [vmem:[#allocation2 + $0x38] sm:$0xff]
        %v349 = vld [vmem:[#allocation2 + $0x40] sm:$0xff]
        %v350 = vld [vmem:[#allocation2 + $0x48] sm:$0xff]
        %v351 = vld [vmem:[#allocation2 + $0x50] sm:$0xff]
        %v352 = vld [vmem:[#allocation2 + $0x58] sm:$0xff]
        %v353 = vld [vmem:[#allocation2 + $0x60] sm:$0xff]
        %v354 = vld [vmem:[#allocation2 + $0x68] sm:$0xff]
        %v355 = vld [vmem:[#allocation2 + $0x70] sm:$0xff]
        %v356 = vld [vmem:[#allocation2 + $0x78] sm:$0xff]
        %v357 = vld [vmem:[#allocation2 + $0x80] sm:$0xff]
        %v358 = vld [vmem:[#allocation2 + $0x88] sm:$0xff]
        %v359 = vld [vmem:[#allocation2 + $0x90] sm:$0xff]
        %v360 = vld [vmem:[#allocation2 + $0x98] sm:$0xff]
        %v361 = vld [vmem:[#allocation2 + $0xa0] sm:$0xff]
        %v362 = vld [vmem:[#allocation2 + $0xa8] sm:$0xff]
        %v363 = vld [vmem:[#allocation2 + $0xb0] sm:$0xff]
        %v364 = vld [vmem:[#allocation2 + $0xb8] sm:$0xff]
        %v365 = vld [vmem:[#allocation2 + $0xc0] sm:$0xff]
        %v366 = vld [vmem:[#allocation2 + $0xc8] sm:$0xff]
        %v367 = vld [vmem:[#allocation2 + $0xd0] sm:$0xff]
        %v368 = vld [vmem:[#allocation2 + $0xd8] sm:$0xff]
        %v369 = vld [vmem:[#allocation2 + $0xe0] sm:$0xff]
        %v370 = vld [vmem:[#allocation2 + $0xe8] sm:$0xff]
        %v371 = vld [vmem:[#allocation2 + $0xf0] sm:$0xff]
        %v372 = vld [vmem:[#allocation2 + $0xf8] sm:$0xff]
        %v373 = vld [vmem:[#allocation2 + $0x100] sm:$0xff]
        %v374 = vld [vmem:[#allocation2 + $0x108] sm:$0xff]
        %v375 = vld [vmem:[#allocation2 + $0x110] sm:$0xff]
        %v376 = vld [vmem:[#allocation2 + $0x118] sm:$0xff]
        %v377 = vld [vmem:[#allocation2 + $0x120] sm:$0xff]
        %v378 = vld [vmem:[#allocation2 + $0x128] sm:$0xff]
        %v379 = vld [vmem:[#allocation2 + $0x130] sm:$0xff]
        %v380 = vld [vmem:[#allocation2 + $0x138] sm:$0xff]
        %v381 = vld [vmem:[#allocation2 + $0x140] sm:$0xff]
        %v382 = vld [vmem:[#allocation2 + $0x148] sm:$0xff]
        %v383 = vld [vmem:[#allocation2 + $0x150] sm:$0xff]
        %v384 = vld [vmem:[#allocation2 + $0x158] sm:$0xff]
        %v385 = vld [vmem:[#allocation2 + $0x160] sm:$0xff]
        %v386 = vld [vmem:[#allocation2 + $0x168] sm:$0xff]
        %v387 = vld [vmem:[#allocation2 + $0x170] sm:$0xff]
        %v388 = vld [vmem:[#allocation2 + $0x178] sm:$0xff]
        %v389 = vld [vmem:[#allocation2 + $0x180] sm:$0xff]
        %v390 = vld [vmem:[#allocation2 + $0x188] sm:$0xff]
        %v391 = vld [vmem:[#allocation2 + $0x190] sm:$0xff]
        %v392 = vld [vmem:[#allocation2 + $0x198] sm:$0xff]
        %v393 = vld [vmem:[#allocation6 + $0x1] sm:$0x1]
        %v394 = vlaneseq
        %v395 = vshrl.u32 %v394, 7
        %v396 = vsub.s32 0, %v395
        %v397 = vrot.slane %v393, %v396
        %398 = vmatprep.subr.mxu0 0.0
        %399 = vmatpush1.msra.mxu0 %v345
        %400 = vmatprep.subr.mxu0 0.0
        %401 = vmatpush1.msra.mxu0 %v346
        %402 = vmatprep.subr.mxu0 0.0
        %403 = vmatpush1.msra.mxu0 %v347
        %404 = vmatprep.subr.mxu0 0.0
        %405 = vmatpush1.msra.mxu0 %v348
        %406 = vmatprep.subr.mxu0 0.0
        %407 = vmatpush1.msra.mxu0 %v349
        %408 = vmatprep.subr.mxu0 0.0
        %409 = vmatpush1.msra.mxu0 %v350
        %410 = vmatprep.subr.mxu0 0.0
        %411 = vmatpush1.msra.mxu0 %v351
        %412 = vmatprep.subr.mxu0 0.0
        %413 = vmatpush1.msra.mxu0 %v352
        %414 = vmatprep.subr.mxu0 0.0
        %415 = vmatpush1.msra.mxu0 %v353
        %416 = vmatprep.subr.mxu0 0.0
        %417 = vmatpush1.msra.mxu0 %v354
        %418 = vmatprep.subr.mxu0 0.0
        %419 = vmatpush1.msra.mxu0 %v355
        %420 = vmatprep.subr.mxu0 0.0
        %421 = vmatpush1.msra.mxu0 %v356
        %422 = vmatprep.subr.mxu0 0.0
        %423 = vmatpush1.msra.mxu0 %v357
        %424 = vmatprep.subr.mxu0 0.0
        %425 = vmatpush1.msra.mxu0 %v358
        %426 = vmatprep.subr.mxu0 0.0
        %427 = vmatpush1.msra.mxu0 %v359
        %428 = vmatprep.subr.mxu0 0.0
        %429 = vmatpush1.msra.mxu0 %v360
        %430 = vmatprep.subr.mxu0 0.0
        %431 = vmatpush1.msra.mxu0 %v361
        %432 = vmatprep.subr.mxu0 0.0
        %433 = vmatpush1.msra.mxu0 %v362
        %434 = vmatprep.subr.mxu0 0.0
        %435 = vmatpush1.msra.mxu0 %v363
        %436 = vmatprep.subr.mxu0 0.0
        %437 = vmatpush1.msra.mxu0 %v364
        %438 = vmatprep.subr.mxu0 0.0
        %439 = vmatpush1.msra.mxu0 %v365
        %440 = vmatprep.subr.mxu0 0.0
        %441 = vmatpush1.msra.mxu0 %v366
        %442 = vmatprep.subr.mxu0 0.0
        %443 = vmatpush1.msra.mxu0 %v367
        %444 = vmatprep.subr.mxu0 0.0
        %445 = vmatpush1.msra.mxu0 %v368
        %446 = vmatprep.subr.mxu0 0.0
        %447 = vmatpush1.msra.mxu0 %v369
        %448 = vmatprep.subr.mxu0 0.0
        %449 = vmatpush1.msra.mxu0 %v370
        %450 = vmatprep.subr.mxu0 0.0
        %451 = vmatpush1.msra.mxu0 %v371
        %452 = vmatprep.subr.mxu0 0.0
        %453 = vmatpush1.msra.mxu0 %v372
        %454 = vmatprep.subr.mxu0 0.0
        %455 = vmatpush1.msra.mxu0 %v373
        %456 = vmatprep.subr.mxu0 0.0
        %457 = vmatpush1.msra.mxu0 %v374
        %458 = vmatprep.subr.mxu0 0.0
        %459 = vmatpush1.msra.mxu0 %v375
        %460 = vmatprep.subr.mxu0 0.0
        %461 = vmatpush1.msra.mxu0 %v376
        %462 = vmatprep.mubr.f32.mxu0 %v331
        %463 = vmatmul.mubr.f32.gmra.mrb[0].mxu0 %v337
        %v464 = vpop.f32.mrb[0].mxu0
        %v465 = vadd.f32 %v397, %v464
        %v466 = vpop.f32.mrb[0].mxu0
        %467 = vdwg.mxu0
        %468 = vmatprep.subr.mxu0 0.0
        %469 = vmatpush1.msra.mxu0 %v377
        %470 = vmatprep.subr.mxu0 0.0
        %471 = vmatpush1.msra.mxu0 %v378
        %472 = vmatprep.subr.mxu0 0.0
        %473 = vmatpush1.msra.mxu0 %v379
        %474 = vmatprep.subr.mxu0 0.0
        %475 = vmatpush1.msra.mxu0 %v380
        %476 = vmatprep.subr.mxu0 0.0
        %477 = vmatpush1.msra.mxu0 %v381
        %478 = vmatprep.subr.mxu0 0.0
        %479 = vmatpush1.msra.mxu0 %v382
        %480 = vmatprep.subr.mxu0 0.0
        %481 = vmatpush1.msra.mxu0 %v383
        %482 = vmatprep.subr.mxu0 0.0
        %483 = vmatpush1.msra.mxu0 %v384
        %484 = vmatprep.subr.mxu0 0.0
        %485 = vmatpush1.msra.mxu0 %v385
        %486 = vmatprep.subr.mxu0 0.0
        %487 = vmatpush1.msra.mxu0 %v386
        %488 = vmatprep.subr.mxu0 0.0
        %489 = vmatpush1.msra.mxu0 %v387
        %490 = vmatprep.subr.mxu0 0.0
        %491 = vmatpush1.msra.mxu0 %v388
        %492 = vmatprep.subr.mxu0 0.0
        %493 = vmatpush1.msra.mxu0 %v389
        %494 = vmatprep.subr.mxu0 0.0
        %495 = vmatpush1.msra.mxu0 %v390
        %496 = vmatprep.subr.mxu0 0.0
        %497 = vmatpush1.msra.mxu0 %v391
        %498 = vmatprep.subr.mxu0 0.0
        %499 = vmatpush1.msra.mxu0 %v392
        %500 = vmatprep.subr.mxu0 0.0
        %501 = vmatpush1.msra.mxu0 0.0
        %502 = vmatprep.subr.mxu0 0.0
        %503 = vmatpush1.msra.mxu0 0.0
        %504 = vmatprep.subr.mxu0 0.0
        %505 = vmatpush1.msra.mxu0 0.0
        %506 = vmatprep.subr.mxu0 0.0
        %507 = vmatpush1.msra.mxu0 0.0
        %508 = vmatprep.subr.mxu0 0.0
        %509 = vmatpush1.msra.mxu0 0.0
        %510 = vmatprep.subr.mxu0 0.0
        %511 = vmatpush1.msra.mxu0 0.0
        %512 = vmatprep.subr.mxu0 0.0
        %513 = vmatpush1.msra.mxu0 0.0
        %514 = vmatprep.subr.mxu0 0.0
        %515 = vmatpush1.msra.mxu0 0.0
        %516 = vmatprep.subr.mxu0 0.0
        %517 = vmatpush1.msra.mxu0 0.0
        %518 = vmatprep.subr.mxu0 0.0
        %519 = vmatpush1.msra.mxu0 0.0
        %520 = vmatprep.subr.mxu0 0.0
        %521 = vmatpush1.msra.mxu0 0.0
        %522 = vmatprep.subr.mxu0 0.0
        %523 = vmatpush1.msra.mxu0 0.0
        %524 = vmatprep.subr.mxu0 0.0
        %525 = vmatpush1.msra.mxu0 0.0
        %526 = vmatprep.subr.mxu0 0.0
        %527 = vmatpush1.msra.mxu0 0.0
        %528 = vmatprep.subr.mxu0 0.0
        %529 = vmatpush1.msra.mxu0 0.0
        %530 = vmatprep.subr.mxu0 0.0
        %531 = vmatpush1.msra.mxu0 0.0
        %532 = vmatprep.mubr.f32.mxu0 0.0
        %533 = vmatmul.mubr.f32.gmra.mrb[0].mxu0 %v343
        %v534 = vpop.f32.mrb[0].mxu0
        %v535 = vadd.f32 %v465, %v534
        %v536 = vpop.f32.mrb[0].mxu0
        %537 = vdwg.mxu0
        %v538 = vmax.f32 %v535, 0.0
        %v540 = vrot.slane %v538, 7
        %v542 = vsel %vm336, 0.0, %v540
        %v543 = vsel %vm336, %v540, 0.0
        %v546 = vrot.slane %v542, 1
        %v547 = vrot.slane %v543, 1
        %v548 = vsel %vm340, %v546, %v547
        %549 = vrot.lane.b32.xlu0 %v548, 64
        %v550 = vpop.permute.xlu0 %549
        %vm552 = vcmask 1045504
        %v553 = vrot.slane %v542, 2
        %v554 = vrot.slane %v543, 2
        %v555 = vsel %vm552, %v553, %v554
        %vm556 = vcmask 523264
        %v557 = vsel %vm556, %v542, %v550
        %v558 = vld [vmem:[#allocation4] sm:$0xff]
        %v559 = vld [vmem:[#allocation4 + $0x8] sm:$0xff]
        %v560 = vld [vmem:[#allocation4 + $0x10] sm:$0xff]
        %v561 = vld [vmem:[#allocation4 + $0x18] sm:$0xff]
        %v562 = vld [vmem:[#allocation4 + $0x20] sm:$0xff]
        %v563 = vld [vmem:[#allocation4 + $0x28] sm:$0xff]
        %v564 = vld [vmem:[#allocation4 + $0x30] sm:$0xff]
        %v565 = vld [vmem:[#allocation4 + $0x38] sm:$0xff]
        %v566 = vld [vmem:[#allocation4 + $0x40] sm:$0xff]
        %v567 = vld [vmem:[#allocation4 + $0x48] sm:$0xff]
        %v568 = vld [vmem:[#allocation4 + $0x50] sm:$0xff]
        %v569 = vld [vmem:[#allocation4 + $0x58] sm:$0xff]
        %v570 = vld [vmem:[#allocation4 + $0x60] sm:$0xff]
        %v571 = vld [vmem:[#allocation4 + $0x68] sm:$0xff]
        %v572 = vld [vmem:[#allocation4 + $0x70] sm:$0xff]
        %v573 = vld [vmem:[#allocation4 + $0x78] sm:$0xff]
        %v574 = vld [vmem:[#allocation4 + $0x80] sm:$0xff]
        %v575 = vld [vmem:[#allocation4 + $0x88] sm:$0xff]
        %v576 = vld [vmem:[#allocation4 + $0x90] sm:$0xff]
        %v577 = vld [vmem:[#allocation4 + $0x98] sm:$0xff]
        %v578 = vld [vmem:[#allocation4 + $0xa0] sm:$0xff]
        %v579 = vld [vmem:[#allocation4 + $0xa8] sm:$0xff]
        %v580 = vld [vmem:[#allocation4 + $0xb0] sm:$0xff]
        %v581 = vld [vmem:[#allocation4 + $0xb8] sm:$0xff]
        %v582 = vld [vmem:[#allocation6 + $0x4] sm:$0x1]
        %v583 = vlaneseq
        %v584 = vshrl.u32 %v583, 7
        %v585 = vsub.s32 0, %v584
        %v586 = vrot.slane %v582, %v585
        %v587 = vsel %vm556, %v555, 0
        %589 = vmatprep.subr.mxu0 0.0
        %590 = vmatpush1.msra.mxu0 %v558
        %591 = vmatprep.subr.mxu0 0.0
        %592 = vmatpush1.msra.mxu0 %v559
        %593 = vmatprep.subr.mxu0 0.0
        %594 = vmatpush1.msra.mxu0 %v560
        %595 = vmatprep.subr.mxu0 0.0
        %596 = vmatpush1.msra.mxu0 %v561
        %597 = vmatprep.subr.mxu0 0.0
        %598 = vmatpush1.msra.mxu0 %v562
        %599 = vmatprep.subr.mxu0 0.0
        %600 = vmatpush1.msra.mxu0 %v563
        %601 = vmatprep.subr.mxu0 0.0
        %602 = vmatpush1.msra.mxu0 %v564
        %603 = vmatprep.subr.mxu0 0.0
        %604 = vmatpush1.msra.mxu0 %v565
        %605 = vmatprep.subr.mxu0 0.0
        %606 = vmatpush1.msra.mxu0 %v566
        %607 = vmatprep.subr.mxu0 0.0
        %608 = vmatpush1.msra.mxu0 %v567
        %609 = vmatprep.subr.mxu0 0.0
        %610 = vmatpush1.msra.mxu0 %v568
        %611 = vmatprep.subr.mxu0 0.0
        %612 = vmatpush1.msra.mxu0 %v569
        %613 = vmatprep.subr.mxu0 0.0
        %614 = vmatpush1.msra.mxu0 %v570
        %615 = vmatprep.subr.mxu0 0.0
        %616 = vmatpush1.msra.mxu0 %v571
        %617 = vmatprep.subr.mxu0 0.0
        %618 = vmatpush1.msra.mxu0 %v572
        %619 = vmatprep.subr.mxu0 0.0
        %620 = vmatpush1.msra.mxu0 %v573
        %621 = vmatprep.subr.mxu0 0.0
        %622 = vmatpush1.msra.mxu0 %v574
        %623 = vmatprep.subr.mxu0 0.0
        %624 = vmatpush1.msra.mxu0 %v575
        %625 = vmatprep.subr.mxu0 0.0
        %626 = vmatpush1.msra.mxu0 %v576
        %627 = vmatprep.subr.mxu0 0.0
        %628 = vmatpush1.msra.mxu0 %v577
        %629 = vmatprep.subr.mxu0 0.0
        %630 = vmatpush1.msra.mxu0 %v578
        %631 = vmatprep.subr.mxu0 0.0
        %632 = vmatpush1.msra.mxu0 %v579
        %633 = vmatprep.subr.mxu0 0.0
        %634 = vmatpush1.msra.mxu0 %v580
        %635 = vmatprep.subr.mxu0 0.0
        %636 = vmatpush1.msra.mxu0 %v581
        %637 = vmatprep.subr.mxu0 0.0
        %638 = vmatpush1.msra.mxu0 0.0
        %639 = vmatprep.subr.mxu0 0.0
        %640 = vmatpush1.msra.mxu0 0.0
        %641 = vmatprep.subr.mxu0 0.0
        %642 = vmatpush1.msra.mxu0 0.0
        %643 = vmatprep.subr.mxu0 0.0
        %644 = vmatpush1.msra.mxu0 0.0
        %645 = vmatprep.subr.mxu0 0.0
        %646 = vmatpush1.msra.mxu0 0.0
        %647 = vmatprep.subr.mxu0 0.0
        %648 = vmatpush1.msra.mxu0 0.0
        %649 = vmatprep.subr.mxu0 0.0
        %650 = vmatpush1.msra.mxu0 0.0
        %651 = vmatprep.subr.mxu0 0.0
        %652 = vmatpush1.msra.mxu0 0.0
        %653 = vmatprep.mubr.f32.mxu0 %v587
        %654 = vmatmul.mubr.f32.gmra.mrb[0].mxu0 %v557
        %v655 = vpop.f32.mrb[0].mxu0
        %v656 = vadd.f32 %v586, %v655
        %v657 = vpop.f32.mrb[0].mxu0
        %658 = vdwg.mxu0
        %v659 = vmax.f32 %v656, 0.0
        %660 = vrot.lane.b32.xlu0 %v538, 64
        %v661 = vpop.permute.xlu0 %660
        %v663 = vadd.f32 %v659, %v661
        %v664 = vmax.f32 %v663, 0.0
        %v666 = vrot.slane %v664, 1
        %v668 = vadd.f32 %v664, %v666
        %v669 = vrot.slane %v664, 2
        %v671 = vadd.f32 %v668, %v669
        %v672 = vmul.f32 %v671, 0.33333334
        %v675 = vrot.slane %v331, 1
        %v677 = vrot.slane %v337, 2
        %v678 = vrot.slane 0.0, 2
        %v679 = vsel %vm552, %v677, %v678
        %v681 = vld [vmem:[#allocation2 + $0x1a0] sm:$0xff]
        %v682 = vld [vmem:[#allocation2 + $0x1a8] sm:$0xff]
        %v683 = vld [vmem:[#allocation2 + $0x1b0] sm:$0xff]
        %v684 = vld [vmem:[#allocation2 + $0x1b8] sm:$0xff]
        %v685 = vld [vmem:[#allocation2 + $0x1c0] sm:$0xff]
        %v686 = vld [vmem:[#allocation2 + $0x1c8] sm:$0xff]
        %v687 = vld [vmem:[#allocation2 + $0x1d0] sm:$0xff]
        %v688 = vld [vmem:[#allocation2 + $0x1d8] sm:$0xff]
        %v689 = vld [vmem:[#allocation2 + $0x1e0] sm:$0xff]
        %v690 = vld [vmem:[#allocation2 + $0x1e8] sm:$0xff]
        %v691 = vld [vmem:[#allocation2 + $0x1f0] sm:$0xff]
        %v692 = vld [vmem:[#allocation2 + $0x1f8] sm:$0xff]
        %v693 = vld [vmem:[#allocation2 + $0x200] sm:$0xff]
        %v694 = vld [vmem:[#allocation2 + $0x208] sm:$0xff]
        %v695 = vld [vmem:[#allocation2 + $0x210] sm:$0xff]
        %v696 = vld [vmem:[#allocation2 + $0x218] sm:$0xff]
        %v697 = vld [vmem:[#allocation2 + $0x220] sm:$0xff]
        %v698 = vld [vmem:[#allocation2 + $0x228] sm:$0xff]
        %v699 = vld [vmem:[#allocation2 + $0x230] sm:$0xff]
        %v700 = vld [vmem:[#allocation2 + $0x238] sm:$0xff]
        %v701 = vld [vmem:[#allocation2 + $0x240] sm:$0xff]
        %v702 = vld [vmem:[#allocation2 + $0x248] sm:$0xff]
        %v703 = vld [vmem:[#allocation2 + $0x250] sm:$0xff]
        %v704 = vld [vmem:[#allocation2 + $0x258] sm:$0xff]
        %v705 = vld [vmem:[#allocation2 + $0x260] sm:$0xff]
        %v706 = vld [vmem:[#allocation2 + $0x268] sm:$0xff]
        %v707 = vld [vmem:[#allocation2 + $0x270] sm:$0xff]
        %v708 = vld [vmem:[#allocation2 + $0x278] sm:$0xff]
        %v709 = vld [vmem:[#allocation2 + $0x280] sm:$0xff]
        %v710 = vld [vmem:[#allocation2 + $0x288] sm:$0xff]
        %v711 = vld [vmem:[#allocation2 + $0x290] sm:$0xff]
        %v712 = vld [vmem:[#allocation2 + $0x298] sm:$0xff]
        %v713 = vld [vmem:[#allocation2 + $0x2a0] sm:$0xff]
        %v714 = vld [vmem:[#allocation2 + $0x2a8] sm:$0xff]
        %v715 = vld [vmem:[#allocation2 + $0x2b0] sm:$0xff]
        %v716 = vld [vmem:[#allocation2 + $0x2b8] sm:$0xff]
        %v717 = vld [vmem:[#allocation2 + $0x2c0] sm:$0xff]
        %v718 = vld [vmem:[#allocation2 + $0x2c8] sm:$0xff]
        %v719 = vld [vmem:[#allocation2 + $0x2d0] sm:$0xff]
        %v720 = vld [vmem:[#allocation2 + $0x2d8] sm:$0xff]
        %v721 = vld [vmem:[#allocation2 + $0x2e0] sm:$0xff]
        %v722 = vld [vmem:[#allocation2 + $0x2e8] sm:$0xff]
        %v723 = vld [vmem:[#allocation2 + $0x2f0] sm:$0xff]
        %v724 = vld [vmem:[#allocation2 + $0x2f8] sm:$0xff]
        %v725 = vld [vmem:[#allocation2 + $0x300] sm:$0xff]
        %v726 = vld [vmem:[#allocation2 + $0x308] sm:$0xff]
        %v727 = vld [vmem:[#allocation2 + $0x310] sm:$0xff]
        %v728 = vld [vmem:[#allocation2 + $0x318] sm:$0xff]
        %v729 = vld [vmem:[#allocation2 + $0x320] sm:$0xff]
        %v730 = vld [vmem:[#allocation2 + $0x328] sm:$0xff]
        %v731 = vld [vmem:[#allocation2 + $0x330] sm:$0xff]
        %v732 = vld [vmem:[#allocation2 + $0x338] sm:$0xff]
        %v733 = vld [vmem:[#allocation2 + $0x340] sm:$0xff]
        %v734 = vld [vmem:[#allocation2 + $0x348] sm:$0xff]
        %v735 = vld [vmem:[#allocation2 + $0x350] sm:$0xff]
        %v736 = vld [vmem:[#allocation2 + $0x358] sm:$0xff]
        %v737 = vld [vmem:[#allocation2 + $0x360] sm:$0xff]
        %v738 = vld [vmem:[#allocation2 + $0x368] sm:$0xff]
        %v739 = vld [vmem:[#allocation2 + $0x370] sm:$0xff]
        %v740 = vld [vmem:[#allocation2 + $0x378] sm:$0xff]
        %v741 = vld [vmem:[#allocation2 + $0x380] sm:$0xff]
        %v742 = vld [vmem:[#allocation2 + $0x388] sm:$0xff]
        %v743 = vld [vmem:[#allocation2 + $0x390] sm:$0xff]
        %v744 = vld [vmem:[#allocation2 + $0x398] sm:$0xff]
        %v745 = vld [vmem:[#allocation2 + $0x3a0] sm:$0xff]
        %v746 = vld [vmem:[#allocation2 + $0x3a8] sm:$0xff]
        %v747 = vld [vmem:[#allocation2 + $0x3b0] sm:$0xff]
        %v748 = vld [vmem:[#allocation2 + $0x3b8] sm:$0xff]
        %v749 = vld [vmem:[#allocation2 + $0x3c0] sm:$0xff]
        %v750 = vld [vmem:[#allocation2 + $0x3c8] sm:$0xff]
        %v751 = vld [vmem:[#allocation2 + $0x3d0] sm:$0xff]
        %v752 = vld [vmem:[#allocation2 + $0x3d8] sm:$0xff]
        %v753 = vld [vmem:[#allocation2 + $0x3e0] sm:$0xff]
        %v754 = vld [vmem:[#allocation2 + $0x3e8] sm:$0xff]
        %v755 = vld [vmem:[#allocation2 + $0x3f0] sm:$0xff]
        %v756 = vld [vmem:[#allocation2 + $0x3f8] sm:$0xff]
        %v757 = vld [vmem:[#allocation2 + $0x400] sm:$0xff]
        %v758 = vld [vmem:[#allocation2 + $0x408] sm:$0xff]
        %v759 = vld [vmem:[#allocation2 + $0x410] sm:$0xff]
        %v760 = vld [vmem:[#allocation2 + $0x418] sm:$0xff]
        %v761 = vld [vmem:[#allocation6 + $0x2] sm:$0x1]
        %v762 = vlaneseq
        %v763 = vshrl.u32 %v762, 7
        %v764 = vsub.s32 0, %v763
        %v765 = vrot.slane %v761, %v764
        %766 = vmatprep.subr.mxu0 0.0
        %767 = vmatpush1.msra.mxu0 %v681
        %768 = vmatprep.subr.mxu0 0.0
        %769 = vmatpush1.msra.mxu0 %v682
        %770 = vmatprep.subr.mxu0 0.0
        %771 = vmatpush1.msra.mxu0 %v683
        %772 = vmatprep.subr.mxu0 0.0
        %773 = vmatpush1.msra.mxu0 %v684
        %774 = vmatprep.subr.mxu0 0.0
        %775 = vmatpush1.msra.mxu0 %v685
        %776 = vmatprep.subr.mxu0 0.0
        %777 = vmatpush1.msra.mxu0 %v686
        %778 = vmatprep.subr.mxu0 0.0
        %779 = vmatpush1.msra.mxu0 %v687
        %780 = vmatprep.subr.mxu0 0.0
        %781 = vmatpush1.msra.mxu0 %v688
        %782 = vmatprep.subr.mxu0 0.0
        %783 = vmatpush1.msra.mxu0 %v689
        %784 = vmatprep.subr.mxu0 0.0
        %785 = vmatpush1.msra.mxu0 %v690
        %786 = vmatprep.subr.mxu0 0.0
        %787 = vmatpush1.msra.mxu0 %v691
        %788 = vmatprep.subr.mxu0 0.0
        %789 = vmatpush1.msra.mxu0 %v692
        %790 = vmatprep.subr.mxu0 0.0
        %791 = vmatpush1.msra.mxu0 %v693
        %792 = vmatprep.subr.mxu0 0.0
        %793 = vmatpush1.msra.mxu0 %v694
        %794 = vmatprep.subr.mxu0 0.0
        %795 = vmatpush1.msra.mxu0 %v695
        %796 = vmatprep.subr.mxu0 0.0
        %797 = vmatpush1.msra.mxu0 %v696
        %798 = vmatprep.subr.mxu0 0.0
        %799 = vmatpush1.msra.mxu0 %v697
        %800 = vmatprep.subr.mxu0 0.0
        %801 = vmatpush1.msra.mxu0 %v698
        %802 = vmatprep.subr.mxu0 0.0
        %803 = vmatpush1.msra.mxu0 %v699
        %804 = vmatprep.subr.mxu0 0.0
        %805 = vmatpush1.msra.mxu0 %v700
        %806 = vmatprep.subr.mxu0 0.0
        %807 = vmatpush1.msra.mxu0 %v701
        %808 = vmatprep.subr.mxu0 0.0
        %809 = vmatpush1.msra.mxu0 %v702
        %810 = vmatprep.subr.mxu0 0.0
        %811 = vmatpush1.msra.mxu0 %v703
        %812 = vmatprep.subr.mxu0 0.0
        %813 = vmatpush1.msra.mxu0 %v704
        %814 = vmatprep.subr.mxu0 0.0
        %815 = vmatpush1.msra.mxu0 %v705
        %816 = vmatprep.subr.mxu0 0.0
        %817 = vmatpush1.msra.mxu0 %v706
        %818 = vmatprep.subr.mxu0 0.0
        %819 = vmatpush1.msra.mxu0 %v707
        %820 = vmatprep.subr.mxu0 0.0
        %821 = vmatpush1.msra.mxu0 %v708
        %822 = vmatprep.subr.mxu0 0.0
        %823 = vmatpush1.msra.mxu0 %v709
        %824 = vmatprep.subr.mxu0 0.0
        %825 = vmatpush1.msra.mxu0 %v710
        %826 = vmatprep.subr.mxu0 0.0
        %827 = vmatpush1.msra.mxu0 %v711
        %828 = vmatprep.subr.mxu0 0.0
        %829 = vmatpush1.msra.mxu0 %v712
        %830 = vmatprep.mubr.f32.mxu0 %v331
        %831 = vmatmul.mubr.f32.gmra.mrb[0].mxu0 %v337
        %v832 = vpop.f32.mrb[0].mxu0
        %v833 = vadd.f32 %v765, %v832
        %v834 = vpop.f32.mrb[0].mxu0
        %835 = vdwg.mxu0
        %836 = vmatprep.subr.mxu0 0.0
        %837 = vmatpush1.msra.mxu0 %v713
        %838 = vmatprep.subr.mxu0 0.0
        %839 = vmatpush1.msra.mxu0 %v714
        %840 = vmatprep.subr.mxu0 0.0
        %841 = vmatpush1.msra.mxu0 %v715
        %842 = vmatprep.subr.mxu0 0.0
        %843 = vmatpush1.msra.mxu0 %v716
        %844 = vmatprep.subr.mxu0 0.0
        %845 = vmatpush1.msra.mxu0 %v717
        %846 = vmatprep.subr.mxu0 0.0
        %847 = vmatpush1.msra.mxu0 %v718
        %848 = vmatprep.subr.mxu0 0.0
        %849 = vmatpush1.msra.mxu0 %v719
        %850 = vmatprep.subr.mxu0 0.0
        %851 = vmatpush1.msra.mxu0 %v720
        %852 = vmatprep.subr.mxu0 0.0
        %853 = vmatpush1.msra.mxu0 %v721
        %854 = vmatprep.subr.mxu0 0.0
        %855 = vmatpush1.msra.mxu0 %v722
        %856 = vmatprep.subr.mxu0 0.0
        %857 = vmatpush1.msra.mxu0 %v723
        %858 = vmatprep.subr.mxu0 0.0
        %859 = vmatpush1.msra.mxu0 %v724
        %860 = vmatprep.subr.mxu0 0.0
        %861 = vmatpush1.msra.mxu0 %v725
        %862 = vmatprep.subr.mxu0 0.0
        %863 = vmatpush1.msra.mxu0 %v726
        %864 = vmatprep.subr.mxu0 0.0
        %865 = vmatpush1.msra.mxu0 %v727
        %866 = vmatprep.subr.mxu0 0.0
        %867 = vmatpush1.msra.mxu0 %v728
        %868 = vmatprep.subr.mxu0 0.0
        %869 = vmatpush1.msra.mxu0 %v729
        %870 = vmatprep.subr.mxu0 0.0
        %871 = vmatpush1.msra.mxu0 %v730
        %872 = vmatprep.subr.mxu0 0.0
        %873 = vmatpush1.msra.mxu0 %v731
        %874 = vmatprep.subr.mxu0 0.0
        %875 = vmatpush1.msra.mxu0 %v732
        %876 = vmatprep.subr.mxu0 0.0
        %877 = vmatpush1.msra.mxu0 %v733
        %878 = vmatprep.subr.mxu0 0.0
        %879 = vmatpush1.msra.mxu0 %v734
        %880 = vmatprep.subr.mxu0 0.0
        %881 = vmatpush1.msra.mxu0 %v735
        %882 = vmatprep.subr.mxu0 0.0
        %883 = vmatpush1.msra.mxu0 %v736
        %884 = vmatprep.subr.mxu0 0.0
        %885 = vmatpush1.msra.mxu0 %v737
        %886 = vmatprep.subr.mxu0 0.0
        %887 = vmatpush1.msra.mxu0 %v738
        %888 = vmatprep.subr.mxu0 0.0
        %889 = vmatpush1.msra.mxu0 %v739
        %890 = vmatprep.subr.mxu0 0.0
        %891 = vmatpush1.msra.mxu0 %v740
        %892 = vmatprep.subr.mxu0 0.0
        %893 = vmatpush1.msra.mxu0 %v741
        %894 = vmatprep.subr.mxu0 0.0
        %895 = vmatpush1.msra.mxu0 %v742
        %896 = vmatprep.subr.mxu0 0.0
        %897 = vmatpush1.msra.mxu0 %v743
        %898 = vmatprep.subr.mxu0 0.0
        %899 = vmatpush1.msra.mxu0 %v744
        %900 = vmatprep.mubr.f32.mxu0 %v675
        %901 = vmatmul.mubr.f32.gmra.mrb[0].mxu0 %v341
        %v902 = vpop.f32.mrb[0].mxu0
        %v903 = vadd.f32 %v833, %v902
        %v904 = vpop.f32.mrb[0].mxu0
        %905 = vdwg.mxu0
        %906 = vmatprep.subr.mxu0 0.0
        %907 = vmatpush1.msra.mxu0 %v745
        %908 = vmatprep.subr.mxu0 0.0
        %909 = vmatpush1.msra.mxu0 %v746
        %910 = vmatprep.subr.mxu0 0.0
        %911 = vmatpush1.msra.mxu0 %v747
        %912 = vmatprep.subr.mxu0 0.0
        %913 = vmatpush1.msra.mxu0 %v748
        %914 = vmatprep.subr.mxu0 0.0
        %915 = vmatpush1.msra.mxu0 %v749
        %916 = vmatprep.subr.mxu0 0.0
        %917 = vmatpush1.msra.mxu0 %v750
        %918 = vmatprep.subr.mxu0 0.0
        %919 = vmatpush1.msra.mxu0 %v751
        %920 = vmatprep.subr.mxu0 0.0
        %921 = vmatpush1.msra.mxu0 %v752
        %922 = vmatprep.subr.mxu0 0.0
        %923 = vmatpush1.msra.mxu0 %v753
        %924 = vmatprep.subr.mxu0 0.0
        %925 = vmatpush1.msra.mxu0 %v754
        %926 = vmatprep.subr.mxu0 0.0
        %927 = vmatpush1.msra.mxu0 %v755
        %928 = vmatprep.subr.mxu0 0.0
        %929 = vmatpush1.msra.mxu0 %v756
        %930 = vmatprep.subr.mxu0 0.0
        %931 = vmatpush1.msra.mxu0 %v757
        %932 = vmatprep.subr.mxu0 0.0
        %933 = vmatpush1.msra.mxu0 %v758
        %934 = vmatprep.subr.mxu0 0.0
        %935 = vmatpush1.msra.mxu0 %v759
        %936 = vmatprep.subr.mxu0 0.0
        %937 = vmatpush1.msra.mxu0 %v760
        %938 = vmatprep.subr.mxu0 0.0
        %939 = vmatpush1.msra.mxu0 0.0
        %940 = vmatprep.subr.mxu0 0.0
        %941 = vmatpush1.msra.mxu0 0.0
        %942 = vmatprep.subr.mxu0 0.0
        %943 = vmatpush1.msra.mxu0 0.0
        %944 = vmatprep.subr.mxu0 0.0
        %945 = vmatpush1.msra.mxu0 0.0
        %946 = vmatprep.subr.mxu0 0.0
        %947 = vmatpush1.msra.mxu0 0.0
        %948 = vmatprep.subr.mxu0 0.0
        %949 = vmatpush1.msra.mxu0 0.0
        %950 = vmatprep.subr.mxu0 0.0
        %951 = vmatpush1.msra.mxu0 0.0
        %952 = vmatprep.subr.mxu0 0.0
        %953 = vmatpush1.msra.mxu0 0.0
        %954 = vmatprep.subr.mxu0 0.0
        %955 = vmatpush1.msra.mxu0 0.0
        %956 = vmatprep.subr.mxu0 0.0
        %957 = vmatpush1.msra.mxu0 0.0
        %958 = vmatprep.subr.mxu0 0.0
        %959 = vmatpush1.msra.mxu0 0.0
        %960 = vmatprep.subr.mxu0 0.0
        %961 = vmatpush1.msra.mxu0 0.0
        %962 = vmatprep.subr.mxu0 0.0
        %963 = vmatpush1.msra.mxu0 0.0
        %964 = vmatprep.subr.mxu0 0.0
        %965 = vmatpush1.msra.mxu0 0.0
        %966 = vmatprep.subr.mxu0 0.0
        %967 = vmatpush1.msra.mxu0 0.0
        %968 = vmatprep.subr.mxu0 0.0
        %969 = vmatpush1.msra.mxu0 0.0
        %970 = vmatprep.mubr.f32.mxu0 0.0
        %971 = vmatmul.mubr.f32.gmra.mrb[0].mxu0 %v679
        %v972 = vpop.f32.mrb[0].mxu0
        %v973 = vadd.f32 %v903, %v972
        %v974 = vpop.f32.mrb[0].mxu0
        %975 = vdwg.mxu0
        %v976 = vmax.f32 %v973, 0.0
        %v978 = vrot.slane %v976, 7
        %v980 = vsel %vm336, 0.0, %v978
        %v982 = vrot.slane %v980, 1
        %983 = vrot.lane.b32.xlu0 %v982, 64
        %v984 = vpop.permute.xlu0 %983
        %v986 = vrot.slane %v980, 2
        %v988 = vrot.slane %v980, 3
        %989 = vrot.lane.b32.xlu0 %v988, 64
        %v990 = vpop.permute.xlu0 %989
        %vm992 = vcmask 1043456
        %v993 = vrot.slane %v980, 4
        %v994 = vrot.slane 0.0, 4
        %v995 = vsel %vm992, %v993, %v994
        %v996 = vsel %vm556, %v980, %v984
        %v997 = vsel %vm556, %v986, %v990
        %v998 = vld [vmem:[#allocation4 + $0xc0] sm:$0xff]
        %v999 = vld [vmem:[#allocation4 + $0xc8] sm:$0xff]
        %v1000 = vld [vmem:[#allocation4 + $0xd0] sm:$0xff]
        %v1001 = vld [vmem:[#allocation4 + $0xd8] sm:$0xff]
        %v1002 = vld [vmem:[#allocation4 + $0xe0] sm:$0xff]
        %v1003 = vld [vmem:[#allocation4 + $0xe8] sm:$0xff]
        %v1004 = vld [vmem:[#allocation4 + $0xf0] sm:$0xff]
        %v1005 = vld [vmem:[#allocation4 + $0xf8] sm:$0xff]
        %v1006 = vld [vmem:[#allocation4 + $0x100] sm:$0xff]
        %v1007 = vld [vmem:[#allocation4 + $0x108] sm:$0xff]
        %v1008 = vld [vmem:[#allocation4 + $0x110] sm:$0xff]
        %v1009 = vld [vmem:[#allocation4 + $0x118] sm:$0xff]
        %v1010 = vld [vmem:[#allocation4 + $0x120] sm:$0xff]
        %v1011 = vld [vmem:[#allocation4 + $0x128] sm:$0xff]
        %v1012 = vld [vmem:[#allocation4 + $0x130] sm:$0xff]
        %v1013 = vld [vmem:[#allocation4 + $0x138] sm:$0xff]
        %v1014 = vld [vmem:[#allocation4 + $0x140] sm:$0xff]
        %v1015 = vld [vmem:[#allocation4 + $0x148] sm:$0xff]
        %v1016 = vld [vmem:[#allocation4 + $0x150] sm:$0xff]
        %v1017 = vld [vmem:[#allocation4 + $0x158] sm:$0xff]
        %v1018 = vld [vmem:[#allocation4 + $0x160] sm:$0xff]
        %v1019 = vld [vmem:[#allocation4 + $0x168] sm:$0xff]
        %v1020 = vld [vmem:[#allocation4 + $0x170] sm:$0xff]
        %v1021 = vld [vmem:[#allocation4 + $0x178] sm:$0xff]
        %v1022 = vld [vmem:[#allocation4 + $0x180] sm:$0xff]
        %v1023 = vld [vmem:[#allocation4 + $0x188] sm:$0xff]
        %v1024 = vld [vmem:[#allocation4 + $0x190] sm:$0xff]
        %v1025 = vld [vmem:[#allocation4 + $0x198] sm:$0xff]
        %v1026 = vld [vmem:[#allocation4 + $0x1a0] sm:$0xff]
        %v1027 = vld [vmem:[#allocation4 + $0x1a8] sm:$0xff]
        %v1028 = vld [vmem:[#allocation4 + $0x1b0] sm:$0xff]
        %v1029 = vld [vmem:[#allocation4 + $0x1b8] sm:$0xff]
        %v1030 = vld [vmem:[#allocation4 + $0x1c0] sm:$0xff]
        %v1031 = vld [vmem:[#allocation4 + $0x1c8] sm:$0xff]
        %v1032 = vld [vmem:[#allocation4 + $0x1d0] sm:$0xff]
        %v1033 = vld [vmem:[#allocation4 + $0x1d8] sm:$0xff]
        %v1034 = vld [vmem:[#allocation4 + $0x1e0] sm:$0xff]
        %v1035 = vld [vmem:[#allocation4 + $0x1e8] sm:$0xff]
        %v1036 = vld [vmem:[#allocation4 + $0x1f0] sm:$0xff]
        %v1037 = vld [vmem:[#allocation4 + $0x1f8] sm:$0xff]
        %v1038 = vld [vmem:[#allocation6 + $0x5] sm:$0x1]
        %v1039 = vlaneseq
        %v1040 = vshrl.u32 %v1039, 7
        %v1041 = vsub.s32 0, %v1040
        %v1042 = vrot.slane %v1038, %v1041
        %v1043 = vsel %vm556, %v995, 0
        %1045 = vmatprep.subr.mxu0 0.0
        %1046 = vmatpush1.msra.mxu0 %v998
        %1047 = vmatprep.subr.mxu0 0.0
        %1048 = vmatpush1.msra.mxu0 %v999
        %1049 = vmatprep.subr.mxu0 0.0
        %1050 = vmatpush1.msra.mxu0 %v1000
        %1051 = vmatprep.subr.mxu0 0.0
        %1052 = vmatpush1.msra.mxu0 %v1001
        %1053 = vmatprep.subr.mxu0 0.0
        %1054 = vmatpush1.msra.mxu0 %v1002
        %1055 = vmatprep.subr.mxu0 0.0
        %1056 = vmatpush1.msra.mxu0 %v1003
        %1057 = vmatprep.subr.mxu0 0.0
        %1058 = vmatpush1.msra.mxu0 %v1004
        %1059 = vmatprep.subr.mxu0 0.0
        %1060 = vmatpush1.msra.mxu0 %v1005
        %1061 = vmatprep.subr.mxu0 0.0
        %1062 = vmatpush1.msra.mxu0 %v1006
        %1063 = vmatprep.subr.mxu0 0.0
        %1064 = vmatpush1.msra.mxu0 %v1007
        %1065 = vmatprep.subr.mxu0 0.0
        %1066 = vmatpush1.msra.mxu0 %v1008
        %1067 = vmatprep.subr.mxu0 0.0
        %1068 = vmatpush1.msra.mxu0 %v1009
        %1069 = vmatprep.subr.mxu0 0.0
        %1070 = vmatpush1.msra.mxu0 %v1010
        %1071 = vmatprep.subr.mxu0 0.0
        %1072 = vmatpush1.msra.mxu0 %v1011
        %1073 = vmatprep.subr.mxu0 0.0
        %1074 = vmatpush1.msra.mxu0 %v1012
        %1075 = vmatprep.subr.mxu0 0.0
        %1076 = vmatpush1.msra.mxu0 %v1013
        %1077 = vmatprep.subr.mxu0 0.0
        %1078 = vmatpush1.msra.mxu0 %v1014
        %1079 = vmatprep.subr.mxu0 0.0
        %1080 = vmatpush1.msra.mxu0 %v1015
        %1081 = vmatprep.subr.mxu0 0.0
        %1082 = vmatpush1.msra.mxu0 %v1016
        %1083 = vmatprep.subr.mxu0 0.0
        %1084 = vmatpush1.msra.mxu0 %v1017
        %1085 = vmatprep.subr.mxu0 0.0
        %1086 = vmatpush1.msra.mxu0 %v1018
        %1087 = vmatprep.subr.mxu0 0.0
        %1088 = vmatpush1.msra.mxu0 %v1019
        %1089 = vmatprep.subr.mxu0 0.0
        %1090 = vmatpush1.msra.mxu0 %v1020
        %1091 = vmatprep.subr.mxu0 0.0
        %1092 = vmatpush1.msra.mxu0 %v1021
        %1093 = vmatprep.subr.mxu0 0.0
        %1094 = vmatpush1.msra.mxu0 %v1022
        %1095 = vmatprep.subr.mxu0 0.0
        %1096 = vmatpush1.msra.mxu0 %v1023
        %1097 = vmatprep.subr.mxu0 0.0
        %1098 = vmatpush1.msra.mxu0 %v1024
        %1099 = vmatprep.subr.mxu0 0.0
        %1100 = vmatpush1.msra.mxu0 %v1025
        %1101 = vmatprep.subr.mxu0 0.0
        %1102 = vmatpush1.msra.mxu0 %v1026
        %1103 = vmatprep.subr.mxu0 0.0
        %1104 = vmatpush1.msra.mxu0 %v1027
        %1105 = vmatprep.subr.mxu0 0.0
        %1106 = vmatpush1.msra.mxu0 %v1028
        %1107 = vmatprep.subr.mxu0 0.0
        %1108 = vmatpush1.msra.mxu0 %v1029
        %1109 = vmatprep.mubr.f32.mxu0 %v997
        %1110 = vmatmul.mubr.f32.gmra.mrb[0].mxu0 %v996
        %v1111 = vpop.f32.mrb[0].mxu0
        %v1112 = vadd.f32 %v1042, %v1111
        %v1113 = vpop.f32.mrb[0].mxu0
        %1114 = vdwg.mxu0
        %1115 = vmatprep.subr.mxu0 0.0
        %1116 = vmatpush1.msra.mxu0 %v1030
        %1117 = vmatprep.subr.mxu0 0.0
        %1118 = vmatpush1.msra.mxu0 %v1031
        %1119 = vmatprep.subr.mxu0 0.0
        %1120 = vmatpush1.msra.mxu0 %v1032
        %1121 = vmatprep.subr.mxu0 0.0
        %1122 = vmatpush1.msra.mxu0 %v1033
        %1123 = vmatprep.subr.mxu0 0.0
        %1124 = vmatpush1.msra.mxu0 %v1034
        %1125 = vmatprep.subr.mxu0 0.0
        %1126 = vmatpush1.msra.mxu0 %v1035
        %1127 = vmatprep.subr.mxu0 0.0
        %1128 = vmatpush1.msra.mxu0 %v1036
        %1129 = vmatprep.subr.mxu0 0.0
        %1130 = vmatpush1.msra.mxu0 %v1037
        %1131 = vmatprep.subr.mxu0 0.0
        %1132 = vmatpush1.msra.mxu0 0.0
        %1133 = vmatprep.subr.mxu0 0.0
        %1134 = vmatpush1.msra.mxu0 0.0
        %1135 = vmatprep.subr.mxu0 0.0
        %1136 = vmatpush1.msra.mxu0 0.0
        %1137 = vmatprep.subr.mxu0 0.0
        %1138 = vmatpush1.msra.mxu0 0.0
        %1139 = vmatprep.subr.mxu0 0.0
        %1140 = vmatpush1.msra.mxu0 0.0
        %1141 = vmatprep.subr.mxu0 0.0
        %1142 = vmatpush1.msra.mxu0 0.0
        %1143 = vmatprep.subr.mxu0 0.0
        %1144 = vmatpush1.msra.mxu0 0.0
        %1145 = vmatprep.subr.mxu0 0.0
        %1146 = vmatpush1.msra.mxu0 0.0
        %1147 = vmatprep.subr.mxu0 0.0
        %1148 = vmatpush1.msra.mxu0 0.0
        %1149 = vmatprep.subr.mxu0 0.0
        %1150 = vmatpush1.msra.mxu0 0.0
        %1151 = vmatprep.subr.mxu0 0.0
        %1152 = vmatpush1.msra.mxu0 0.0
        %1153 = vmatprep.subr.mxu0 0.0
        %1154 = vmatpush1.msra.mxu0 0.0
        %1155 = vmatprep.subr.mxu0 0.0
        %1156 = vmatpush1.msra.mxu0 0.0
        %1157 = vmatprep.subr.mxu0 0.0
        %1158 = vmatpush1.msra.mxu0 0.0
        %1159 = vmatprep.subr.mxu0 0.0
        %1160 = vmatpush1.msra.mxu0 0.0
        %1161 = vmatprep.subr.mxu0 0.0
        %1162 = vmatpush1.msra.mxu0 0.0
        %1163 = vmatprep.subr.mxu0 0.0
        %1164 = vmatpush1.msra.mxu0 0.0
        %1165 = vmatprep.subr.mxu0 0.0
        %1166 = vmatpush1.msra.mxu0 0.0
        %1167 = vmatprep.subr.mxu0 0.0
        %1168 = vmatpush1.msra.mxu0 0.0
        %1169 = vmatprep.subr.mxu0 0.0
        %1170 = vmatpush1.msra.mxu0 0.0
        %1171 = vmatprep.subr.mxu0 0.0
        %1172 = vmatpush1.msra.mxu0 0.0
        %1173 = vmatprep.subr.mxu0 0.0
        %1174 = vmatpush1.msra.mxu0 0.0
        %1175 = vmatprep.subr.mxu0 0.0
        %1176 = vmatpush1.msra.mxu0 0.0
        %1177 = vmatprep.subr.mxu0 0.0
        %1178 = vmatpush1.msra.mxu0 0.0
        %1179 = vmatprep.mubr.f32.mxu0 0.0
        %1180 = vmatmul.mubr.f32.gmra.mrb[0].mxu0 %v1043
        %v1181 = vpop.f32.mrb[0].mxu0
        %v1182 = vadd.f32 %v1112, %v1181
        %v1183 = vpop.f32.mrb[0].mxu0
        %1184 = vdwg.mxu0
        %v1185 = vmax.f32 %v1182, 0.0
        %1186 = vrot.lane.b32.xlu0 %v976, 64
        %v1187 = vpop.permute.xlu0 %1186
        %v1189 = vadd.f32 %v1185, %v1187
        %v1190 = vmax.f32 %v1189, 0.0
        %v1192 = vrot.slane %v1190, 1
        %v1194 = vadd.f32 %v1190, %v1192
        %v1195 = vrot.slane %v1190, 2
        %v1197 = vadd.f32 %v1194, %v1195
        %v1198 = vmul.f32 %v1197, 0.33333334
        %v1200 = vrot.slane %v331, 2
        %vm1202 = vcmask 1044480
        %v1203 = vrot.slane %v337, 3
        %v1204 = vrot.slane 0.0, 3
        %v1205 = vsel %vm1202, %v1203, %v1204
        %v1207 = vld [vmem:[#allocation2 + $0x420] sm:$0xff]
        %v1208 = vld [vmem:[#allocation2 + $0x428] sm:$0xff]
        %v1209 = vld [vmem:[#allocation2 + $0x430] sm:$0xff]
        %v1210 = vld [vmem:[#allocation2 + $0x438] sm:$0xff]
        %v1211 = vld [vmem:[#allocation2 + $0x440] sm:$0xff]
        %v1212 = vld [vmem:[#allocation2 + $0x448] sm:$0xff]
        %v1213 = vld [vmem:[#allocation2 + $0x450] sm:$0xff]
        %v1214 = vld [vmem:[#allocation2 + $0x458] sm:$0xff]
        %v1215 = vld [vmem:[#allocation2 + $0x460] sm:$0xff]
        %v1216 = vld [vmem:[#allocation2 + $0x468] sm:$0xff]
        %v1217 = vld [vmem:[#allocation2 + $0x470] sm:$0xff]
        %v1218 = vld [vmem:[#allocation2 + $0x478] sm:$0xff]
        %v1219 = vld [vmem:[#allocation2 + $0x480] sm:$0xff]
        %v1220 = vld [vmem:[#allocation2 + $0x488] sm:$0xff]
        %v1221 = vld [vmem:[#allocation2 + $0x490] sm:$0xff]
        %v1222 = vld [vmem:[#allocation2 + $0x498] sm:$0xff]
        %v1223 = vld [vmem:[#allocation2 + $0x4a0] sm:$0xff]
        %v1224 = vld [vmem:[#allocation2 + $0x4a8] sm:$0xff]
        %v1225 = vld [vmem:[#allocation2 + $0x4b0] sm:$0xff]
        %v1226 = vld [vmem:[#allocation2 + $0x4b8] sm:$0xff]
        %v1227 = vld [vmem:[#allocation2 + $0x4c0] sm:$0xff]
        %v1228 = vld [vmem:[#allocation2 + $0x4c8] sm:$0xff]
        %v1229 = vld [vmem:[#allocation2 + $0x4d0] sm:$0xff]
        %v1230 = vld [vmem:[#allocation2 + $0x4d8] sm:$0xff]
        %v1231 = vld [vmem:[#allocation2 + $0x4e0] sm:$0xff]
        %v1232 = vld [vmem:[#allocation2 + $0x4e8] sm:$0xff]
        %v1233 = vld [vmem:[#allocation2 + $0x4f0] sm:$0xff]
        %v1234 = vld [vmem:[#allocation2 + $0x4f8] sm:$0xff]
        %v1235 = vld [vmem:[#allocation2 + $0x500] sm:$0xff]
        %v1236 = vld [vmem:[#allocation2 + $0x508] sm:$0xff]
        %v1237 = vld [vmem:[#allocation2 + $0x510] sm:$0xff]
        %v1238 = vld [vmem:[#allocation2 + $0x518] sm:$0xff]
        %v1239 = vld [vmem:[#allocation2 + $0x520] sm:$0xff]
        %v1240 = vld [vmem:[#allocation2 + $0x528] sm:$0xff]
        %v1241 = vld [vmem:[#allocation2 + $0x530] sm:$0xff]
        %v1242 = vld [vmem:[#allocation2 + $0x538] sm:$0xff]
        %v1243 = vld [vmem:[#allocation2 + $0x540] sm:$0xff]
        %v1244 = vld [vmem:[#allocation2 + $0x548] sm:$0xff]
        %v1245 = vld [vmem:[#allocation2 + $0x550] sm:$0xff]
        %v1246 = vld [vmem:[#allocation2 + $0x558] sm:$0xff]
        %v1247 = vld [vmem:[#allocation2 + $0x560] sm:$0xff]
        %v1248 = vld [vmem:[#allocation2 + $0x568] sm:$0xff]
        %v1249 = vld [vmem:[#allocation2 + $0x570] sm:$0xff]
        %v1250 = vld [vmem:[#allocation2 + $0x578] sm:$0xff]
        %v1251 = vld [vmem:[#allocation2 + $0x580] sm:$0xff]
        %v1252 = vld [vmem:[#allocation2 + $0x588] sm:$0xff]
        %v1253 = vld [vmem:[#allocation2 + $0x590] sm:$0xff]
        %v1254 = vld [vmem:[#allocation2 + $0x598] sm:$0xff]
        %v1255 = vld [vmem:[#allocation2 + $0x5a0] sm:$0xff]
        %v1256 = vld [vmem:[#allocation2 + $0x5a8] sm:$0xff]
        %v1257 = vld [vmem:[#allocation2 + $0x5b0] sm:$0xff]
        %v1258 = vld [vmem:[#allocation2 + $0x5b8] sm:$0xff]
        %v1259 = vld [vmem:[#allocation2 + $0x5c0] sm:$0xff]
        %v1260 = vld [vmem:[#allocation2 + $0x5c8] sm:$0xff]
        %v1261 = vld [vmem:[#allocation2 + $0x5d0] sm:$0xff]
        %v1262 = vld [vmem:[#allocation2 + $0x5d8] sm:$0xff]
        %v1263 = vld [vmem:[#allocation2 + $0x5e0] sm:$0xff]
        %v1264 = vld [vmem:[#allocation2 + $0x5e8] sm:$0xff]
        %v1265 = vld [vmem:[#allocation2 + $0x5f0] sm:$0xff]
        %v1266 = vld [vmem:[#allocation2 + $0x5f8] sm:$0xff]
        %v1267 = vld [vmem:[#allocation2 + $0x600] sm:$0xff]
        %v1268 = vld [vmem:[#allocation2 + $0x608] sm:$0xff]
        %v1269 = vld [vmem:[#allocation2 + $0x610] sm:$0xff]
        %v1270 = vld [vmem:[#allocation2 + $0x618] sm:$0xff]
        %v1271 = vld [vmem:[#allocation2 + $0x620] sm:$0xff]
        %v1272 = vld [vmem:[#allocation2 + $0x628] sm:$0xff]
        %v1273 = vld [vmem:[#allocation2 + $0x630] sm:$0xff]
        %v1274 = vld [vmem:[#allocation2 + $0x638] sm:$0xff]
        %v1275 = vld [vmem:[#allocation2 + $0x640] sm:$0xff]
        %v1276 = vld [vmem:[#allocation2 + $0x648] sm:$0xff]
        %v1277 = vld [vmem:[#allocation2 + $0x650] sm:$0xff]
        %v1278 = vld [vmem:[#allocation2 + $0x658] sm:$0xff]
        %v1279 = vld [vmem:[#allocation2 + $0x660] sm:$0xff]
        %v1280 = vld [vmem:[#allocation2 + $0x668] sm:$0xff]
        %v1281 = vld [vmem:[#allocation2 + $0x670] sm:$0xff]
        %v1282 = vld [vmem:[#allocation2 + $0x678] sm:$0xff]
        %v1283 = vld [vmem:[#allocation2 + $0x680] sm:$0xff]
        %v1284 = vld [vmem:[#allocation2 + $0x688] sm:$0xff]
        %v1285 = vld [vmem:[#allocation2 + $0x690] sm:$0xff]
        %v1286 = vld [vmem:[#allocation2 + $0x698] sm:$0xff]
        %v1287 = vld [vmem:[#allocation2 + $0x6a0] sm:$0xff]
        %v1288 = vld [vmem:[#allocation2 + $0x6a8] sm:$0xff]
        %v1289 = vld [vmem:[#allocation2 + $0x6b0] sm:$0xff]
        %v1290 = vld [vmem:[#allocation2 + $0x6b8] sm:$0xff]
        %v1291 = vld [vmem:[#allocation2 + $0x6c0] sm:$0xff]
        %v1292 = vld [vmem:[#allocation2 + $0x6c8] sm:$0xff]
        %v1293 = vld [vmem:[#allocation2 + $0x6d0] sm:$0xff]
        %v1294 = vld [vmem:[#allocation2 + $0x6d8] sm:$0xff]
        %v1295 = vld [vmem:[#allocation2 + $0x6e0] sm:$0xff]
        %v1296 = vld [vmem:[#allocation2 + $0x6e8] sm:$0xff]
        %v1297 = vld [vmem:[#allocation2 + $0x6f0] sm:$0xff]
        %v1298 = vld [vmem:[#allocation2 + $0x6f8] sm:$0xff]
        %v1299 = vld [vmem:[#allocation2 + $0x700] sm:$0xff]
        %v1300 = vld [vmem:[#allocation2 + $0x708] sm:$0xff]
        %v1301 = vld [vmem:[#allocation2 + $0x710] sm:$0xff]
        %v1302 = vld [vmem:[#allocation2 + $0x718] sm:$0xff]
        %v1303 = vld [vmem:[#allocation2 + $0x720] sm:$0xff]
        %v1304 = vld [vmem:[#allocation2 + $0x728] sm:$0xff]
        %v1305 = vld [vmem:[#allocation2 + $0x730] sm:$0xff]
        %v1306 = vld [vmem:[#allocation2 + $0x738] sm:$0xff]
        %v1307 = vld [vmem:[#allocation2 + $0x740] sm:$0xff]
        %v1308 = vld [vmem:[#allocation2 + $0x748] sm:$0xff]
        %v1309 = vld [vmem:[#allocation2 + $0x750] sm:$0xff]
        %v1310 = vld [vmem:[#allocation2 + $0x758] sm:$0xff]
        %v1311 = vld [vmem:[#allocation2 + $0x760] sm:$0xff]
        %v1312 = vld [vmem:[#allocation2 + $0x768] sm:$0xff]
        %v1313 = vld [vmem:[#allocation2 + $0x770] sm:$0xff]
        %v1314 = vld [vmem:[#allocation2 + $0x778] sm:$0xff]
        %v1315 = vld [vmem:[#allocation2 + $0x780] sm:$0xff]
        %v1316 = vld [vmem:[#allocation2 + $0x788] sm:$0xff]
        %v1317 = vld [vmem:[#allocation2 + $0x790] sm:$0xff]
        %v1318 = vld [vmem:[#allocation2 + $0x798] sm:$0xff]
        %v1319 = vld [vmem:[#allocation6 + $0x3] sm:$0x1]
        %v1320 = vlaneseq
        %v1321 = vshrl.u32 %v1320, 7
        %v1322 = vsub.s32 0, %v1321
        %v1323 = vrot.slane %v1319, %v1322
        %1324 = vmatprep.subr.mxu0 0.0
        %1325 = vmatpush1.msra.mxu0 %v1207
        %1326 = vmatprep.subr.mxu0 0.0
        %1327 = vmatpush1.msra.mxu0 %v1208
        %1328 = vmatprep.subr.mxu0 0.0
        %1329 = vmatpush1.msra.mxu0 %v1209
        %1330 = vmatprep.subr.mxu0 0.0
        %1331 = vmatpush1.msra.mxu0 %v1210
        %1332 = vmatprep.subr.mxu0 0.0
        %1333 = vmatpush1.msra.mxu0 %v1211
        %1334 = vmatprep.subr.mxu0 0.0
        %1335 = vmatpush1.msra.mxu0 %v1212
        %1336 = vmatprep.subr.mxu0 0.0
        %1337 = vmatpush1.msra.mxu0 %v1213
        %1338 = vmatprep.subr.mxu0 0.0
        %1339 = vmatpush1.msra.mxu0 %v1214
        %1340 = vmatprep.subr.mxu0 0.0
        %1341 = vmatpush1.msra.mxu0 %v1215
        %1342 = vmatprep.subr.mxu0 0.0
        %1343 = vmatpush1.msra.mxu0 %v1216
        %1344 = vmatprep.subr.mxu0 0.0
        %1345 = vmatpush1.msra.mxu0 %v1217
        %1346 = vmatprep.subr.mxu0 0.0
        %1347 = vmatpush1.msra.mxu0 %v1218
        %1348 = vmatprep.subr.mxu0 0.0
        %1349 = vmatpush1.msra.mxu0 %v1219
        %1350 = vmatprep.subr.mxu0 0.0
        %1351 = vmatpush1.msra.mxu0 %v1220
        %1352 = vmatprep.subr.mxu0 0.0
        %1353 = vmatpush1.msra.mxu0 %v1221
        %1354 = vmatprep.subr.mxu0 0.0
        %1355 = vmatpush1.msra.mxu0 %v1222
        %1356 = vmatprep.subr.mxu0 0.0
        %1357 = vmatpush1.msra.mxu0 %v1223
        %1358 = vmatprep.subr.mxu0 0.0
        %1359 = vmatpush1.msra.mxu0 %v1224
        %1360 = vmatprep.subr.mxu0 0.0
        %1361 = vmatpush1.msra.mxu0 %v1225
        %1362 = vmatprep.subr.mxu0 0.0
        %1363 = vmatpush1.msra.mxu0 %v1226
        %1364 = vmatprep.subr.mxu0 0.0
        %1365 = vmatpush1.msra.mxu0 %v1227
        %1366 = vmatprep.subr.mxu0 0.0
        %1367 = vmatpush1.msra.mxu0 %v1228
        %1368 = vmatprep.subr.mxu0 0.0
        %1369 = vmatpush1.msra.mxu0 %v1229
        %1370 = vmatprep.subr.mxu0 0.0
        %1371 = vmatpush1.msra.mxu0 %v1230
        %1372 = vmatprep.subr.mxu0 0.0
        %1373 = vmatpush1.msra.mxu0 %v1231
        %1374 = vmatprep.subr.mxu0 0.0
        %1375 = vmatpush1.msra.mxu0 %v1232
        %1376 = vmatprep.subr.mxu0 0.0
        %1377 = vmatpush1.msra.mxu0 %v1233
        %1378 = vmatprep.subr.mxu0 0.0
        %1379 = vmatpush1.msra.mxu0 %v1234
        %1380 = vmatprep.subr.mxu0 0.0
        %1381 = vmatpush1.msra.mxu0 %v1235
        %1382 = vmatprep.subr.mxu0 0.0
        %1383 = vmatpush1.msra.mxu0 %v1236
        %1384 = vmatprep.subr.mxu0 0.0
        %1385 = vmatpush1.msra.mxu0 %v1237
        %1386 = vmatprep.subr.mxu0 0.0
        %1387 = vmatpush1.msra.mxu0 %v1238
        %1388 = vmatprep.mubr.f32.mxu0 %v331
        %1389 = vmatmul.mubr.f32.gmra.mrb[0].mxu0 %v337
        %v1390 = vpop.f32.mrb[0].mxu0
        %v1391 = vadd.f32 %v1323, %v1390
        %v1392 = vpop.f32.mrb[0].mxu0
        %1393 = vdwg.mxu0
        %1394 = vmatprep.subr.mxu0 0.0
        %1395 = vmatpush1.msra.mxu0 %v1239
        %1396 = vmatprep.subr.mxu0 0.0
        %1397 = vmatpush1.msra.mxu0 %v1240
        %1398 = vmatprep.subr.mxu0 0.0
        %1399 = vmatpush1.msra.mxu0 %v1241
        %1400 = vmatprep.subr.mxu0 0.0
        %1401 = vmatpush1.msra.mxu0 %v1242
        %1402 = vmatprep.subr.mxu0 0.0
        %1403 = vmatpush1.msra.mxu0 %v1243
        %1404 = vmatprep.subr.mxu0 0.0
        %1405 = vmatpush1.msra.mxu0 %v1244
        %1406 = vmatprep.subr.mxu0 0.0
        %1407 = vmatpush1.msra.mxu0 %v1245
        %1408 = vmatprep.subr.mxu0 0.0
        %1409 = vmatpush1.msra.mxu0 %v1246
        %1410 = vmatprep.subr.mxu0 0.0
        %1411 = vmatpush1.msra.mxu0 %v1247
        %1412 = vmatprep.subr.mxu0 0.0
        %1413 = vmatpush1.msra.mxu0 %v1248
        %1414 = vmatprep.subr.mxu0 0.0
        %1415 = vmatpush1.msra.mxu0 %v1249
        %1416 = vmatprep.subr.mxu0 0.0
        %1417 = vmatpush1.msra.mxu0 %v1250
        %1418 = vmatprep.subr.mxu0 0.0
        %1419 = vmatpush1.msra.mxu0 %v1251
        %1420 = vmatprep.subr.mxu0 0.0
        %1421 = vmatpush1.msra.mxu0 %v1252
        %1422 = vmatprep.subr.mxu0 0.0
        %1423 = vmatpush1.msra.mxu0 %v1253
        %1424 = vmatprep.subr.mxu0 0.0
        %1425 = vmatpush1.msra.mxu0 %v1254
        %1426 = vmatprep.subr.mxu0 0.0
        %1427 = vmatpush1.msra.mxu0 %v1255
        %1428 = vmatprep.subr.mxu0 0.0
        %1429 = vmatpush1.msra.mxu0 %v1256
        %1430 = vmatprep.subr.mxu0 0.0
        %1431 = vmatpush1.msra.mxu0 %v1257
        %1432 = vmatprep.subr.mxu0 0.0
        %1433 = vmatpush1.msra.mxu0 %v1258
        %1434 = vmatprep.subr.mxu0 0.0
        %1435 = vmatpush1.msra.mxu0 %v1259
        %1436 = vmatprep.subr.mxu0 0.0
        %1437 = vmatpush1.msra.mxu0 %v1260
        %1438 = vmatprep.subr.mxu0 0.0
        %1439 = vmatpush1.msra.mxu0 %v1261
        %1440 = vmatprep.subr.mxu0 0.0
        %1441 = vmatpush1.msra.mxu0 %v1262
        %1442 = vmatprep.subr.mxu0 0.0
        %1443 = vmatpush1.msra.mxu0 %v1263
        %1444 = vmatprep.subr.mxu0 0.0
        %1445 = vmatpush1.msra.mxu0 %v1264
        %1446 = vmatprep.subr.mxu0 0.0
        %1447 = vmatpush1.msra.mxu0 %v1265
        %1448 = vmatprep.subr.mxu0 0.0
        %1449 = vmatpush1.msra.mxu0 %v1266
        %1450 = vmatprep.subr.mxu0 0.0
        %1451 = vmatpush1.msra.mxu0 %v1267
        %1452 = vmatprep.subr.mxu0 0.0
        %1453 = vmatpush1.msra.mxu0 %v1268
        %1454 = vmatprep.subr.mxu0 0.0
        %1455 = vmatpush1.msra.mxu0 %v1269
        %1456 = vmatprep.subr.mxu0 0.0
        %1457 = vmatpush1.msra.mxu0 %v1270
        %1458 = vmatprep.mubr.f32.mxu0 %v675
        %1459 = vmatmul.mubr.f32.gmra.mrb[0].mxu0 %v341
        %v1460 = vpop.f32.mrb[0].mxu0
        %v1461 = vadd.f32 %v1391, %v1460
        %v1462 = vpop.f32.mrb[0].mxu0
        %1463 = vdwg.mxu0
        %1464 = vmatprep.subr.mxu0 0.0
        %1465 = vmatpush1.msra.mxu0 %v1271
        %1466 = vmatprep.subr.mxu0 0.0
        %1467 = vmatpush1.msra.mxu0 %v1272
        %1468 = vmatprep.subr.mxu0 0.0
        %1469 = vmatpush1.msra.mxu0 %v1273
        %1470 = vmatprep.subr.mxu0 0.0
        %1471 = vmatpush1.msra.mxu0 %v1274
        %1472 = vmatprep.subr.mxu0 0.0
        %1473 = vmatpush1.msra.mxu0 %v1275
        %1474 = vmatprep.subr.mxu0 0.0
        %1475 = vmatpush1.msra.mxu0 %v1276
        %1476 = vmatprep.subr.mxu0 0.0
        %1477 = vmatpush1.msra.mxu0 %v1277
        %1478 = vmatprep.subr.mxu0 0.0
        %1479 = vmatpush1.msra.mxu0 %v1278
        %1480 = vmatprep.subr.mxu0 0.0
        %1481 = vmatpush1.msra.mxu0 %v1279
        %1482 = vmatprep.subr.mxu0 0.0
        %1483 = vmatpush1.msra.mxu0 %v1280
        %1484 = vmatprep.subr.mxu0 0.0
        %1485 = vmatpush1.msra.mxu0 %v1281
        %1486 = vmatprep.subr.mxu0 0.0
        %1487 = vmatpush1.msra.mxu0 %v1282
        %1488 = vmatprep.subr.mxu0 0.0
        %1489 = vmatpush1.msra.mxu0 %v1283
        %1490 = vmatprep.subr.mxu0 0.0
        %1491 = vmatpush1.msra.mxu0 %v1284
        %1492 = vmatprep.subr.mxu0 0.0
        %1493 = vmatpush1.msra.mxu0 %v1285
        %1494 = vmatprep.subr.mxu0 0.0
        %1495 = vmatpush1.msra.mxu0 %v1286
        %1496 = vmatprep.subr.mxu0 0.0
        %1497 = vmatpush1.msra.mxu0 %v1287
        %1498 = vmatprep.subr.mxu0 0.0
        %1499 = vmatpush1.msra.mxu0 %v1288
        %1500 = vmatprep.subr.mxu0 0.0
        %1501 = vmatpush1.msra.mxu0 %v1289
        %1502 = vmatprep.subr.mxu0 0.0
        %1503 = vmatpush1.msra.mxu0 %v1290
        %1504 = vmatprep.subr.mxu0 0.0
        %1505 = vmatpush1.msra.mxu0 %v1291
        %1506 = vmatprep.subr.mxu0 0.0
        %1507 = vmatpush1.msra.mxu0 %v1292
        %1508 = vmatprep.subr.mxu0 0.0
        %1509 = vmatpush1.msra.mxu0 %v1293
        %1510 = vmatprep.subr.mxu0 0.0
        %1511 = vmatpush1.msra.mxu0 %v1294
        %1512 = vmatprep.subr.mxu0 0.0
        %1513 = vmatpush1.msra.mxu0 %v1295
        %1514 = vmatprep.subr.mxu0 0.0
        %1515 = vmatpush1.msra.mxu0 %v1296
        %1516 = vmatprep.subr.mxu0 0.0
        %1517 = vmatpush1.msra.mxu0 %v1297
        %1518 = vmatprep.subr.mxu0 0.0
        %1519 = vmatpush1.msra.mxu0 %v1298
        %1520 = vmatprep.subr.mxu0 0.0
        %1521 = vmatpush1.msra.mxu0 %v1299
        %1522 = vmatprep.subr.mxu0 0.0
        %1523 = vmatpush1.msra.mxu0 %v1300
        %1524 = vmatprep.subr.mxu0 0.0
        %1525 = vmatpush1.msra.mxu0 %v1301
        %1526 = vmatprep.subr.mxu0 0.0
        %1527 = vmatpush1.msra.mxu0 %v1302
        %1528 = vmatprep.mubr.f32.mxu0 %v1200
        %1529 = vmatmul.mubr.f32.gmra.mrb[0].mxu0 %v677
        %v1530 = vpop.f32.mrb[0].mxu0
        %v1531 = vadd.f32 %v1461, %v1530
        %v1532 = vpop.f32.mrb[0].mxu0
        %1533 = vdwg.mxu0
        %1534 = vmatprep.subr.mxu0 0.0
        %1535 = vmatpush1.msra.mxu0 %v1303
        %1536 = vmatprep.subr.mxu0 0.0
        %1537 = vmatpush1.msra.mxu0 %v1304
        %1538 = vmatprep.subr.mxu0 0.0
        %1539 = vmatpush1.msra.mxu0 %v1305
        %1540 = vmatprep.subr.mxu0 0.0
        %1541 = vmatpush1.msra.mxu0 %v1306
        %1542 = vmatprep.subr.mxu0 0.0
        %1543 = vmatpush1.msra.mxu0 %v1307
        %1544 = vmatprep.subr.mxu0 0.0
        %1545 = vmatpush1.msra.mxu0 %v1308
        %1546 = vmatprep.subr.mxu0 0.0
        %1547 = vmatpush1.msra.mxu0 %v1309
        %1548 = vmatprep.subr.mxu0 0.0
        %1549 = vmatpush1.msra.mxu0 %v1310
        %1550 = vmatprep.subr.mxu0 0.0
        %1551 = vmatpush1.msra.mxu0 %v1311
        %1552 = vmatprep.subr.mxu0 0.0
        %1553 = vmatpush1.msra.mxu0 %v1312
        %1554 = vmatprep.subr.mxu0 0.0
        %1555 = vmatpush1.msra.mxu0 %v1313
        %1556 = vmatprep.subr.mxu0 0.0
        %1557 = vmatpush1.msra.mxu0 %v1314
        %1558 = vmatprep.subr.mxu0 0.0
        %1559 = vmatpush1.msra.mxu0 %v1315
        %1560 = vmatprep.subr.mxu0 0.0
        %1561 = vmatpush1.msra.mxu0 %v1316
        %1562 = vmatprep.subr.mxu0 0.0
        %1563 = vmatpush1.msra.mxu0 %v1317
        %1564 = vmatprep.subr.mxu0 0.0
        %1565 = vmatpush1.msra.mxu0 %v1318
        %1566 = vmatprep.subr.mxu0 0.0
        %1567 = vmatpush1.msra.mxu0 0.0
        %1568 = vmatprep.subr.mxu0 0.0
        %1569 = vmatpush1.msra.mxu0 0.0
        %1570 = vmatprep.subr.mxu0 0.0
        %1571 = vmatpush1.msra.mxu0 0.0
        %1572 = vmatprep.subr.mxu0 0.0
        %1573 = vmatpush1.msra.mxu0 0.0
        %1574 = vmatprep.subr.mxu0 0.0
        %1575 = vmatpush1.msra.mxu0 0.0
        %1576 = vmatprep.subr.mxu0 0.0
        %1577 = vmatpush1.msra.mxu0 0.0
        %1578 = vmatprep.subr.mxu0 0.0
        %1579 = vmatpush1.msra.mxu0 0.0
        %1580 = vmatprep.subr.mxu0 0.0
        %1581 = vmatpush1.msra.mxu0 0.0
        %1582 = vmatprep.subr.mxu0 0.0
        %1583 = vmatpush1.msra.mxu0 0.0
        %1584 = vmatprep.subr.mxu0 0.0
        %1585 = vmatpush1.msra.mxu0 0.0
        %1586 = vmatprep.subr.mxu0 0.0
        %1587 = vmatpush1.msra.mxu0 0.0
        %1588 = vmatprep.subr.mxu0 0.0
        %1589 = vmatpush1.msra.mxu0 0.0
        %1590 = vmatprep.subr.mxu0 0.0
        %1591 = vmatpush1.msra.mxu0 0.0
        %1592 = vmatprep.subr.mxu0 0.0
        %1593 = vmatpush1.msra.mxu0 0.0
        %1594 = vmatprep.subr.mxu0 0.0
        %1595 = vmatpush1.msra.mxu0 0.0
        %1596 = vmatprep.subr.mxu0 0.0
        %1597 = vmatpush1.msra.mxu0 0.0
        %1598 = vmatprep.mubr.f32.mxu0 0.0
        %1599 = vmatmul.mubr.f32.gmra.mrb[0].mxu0 %v1205
        %v1600 = vpop.f32.mrb[0].mxu0
        %v1601 = vadd.f32 %v1531, %v1600
        %v1602 = vpop.f32.mrb[0].mxu0
        %1603 = vdwg.mxu0
        %v1604 = vmax.f32 %v1601, 0.0
        %v1606 = vrot.slane %v1604, 7
        %v1608 = vsel %vm336, 0.0, %v1606
        %v1609 = vsel %vm340, %v1608, 0.0
        %v1611 = vrot.slane %v1609, 1
        %1612 = vrot.lane.b32.xlu0 %v1611, 64
        %v1613 = vpop.permute.xlu0 %1612
        %v1615 = vrot.slane %v1609, 2
        %v1617 = vrot.slane %v1609, 3
        %1618 = vrot.lane.b32.xlu0 %v1617, 64
        %v1619 = vpop.permute.xlu0 %1618
        %v1621 = vrot.slane %v1609, 4
        %v1623 = vrot.slane %v1609, 5
        %1624 = vrot.lane.b32.xlu0 %v1623, 64
        %v1625 = vpop.permute.xlu0 %1624
        %v1627 = vrot.slane %v1609, 6
        %v1628 = vsel %vm556, %v1609, %v1613
        %v1629 = vsel %vm556, %v1615, %v1619
        %v1630 = vsel %vm556, %v1621, %v1625
        %v1631 = vld [vmem:[#allocation4 + $0x200] sm:$0xff]
        %v1632 = vld [vmem:[#allocation4 + $0x208] sm:$0xff]
        %v1633 = vld [vmem:[#allocation4 + $0x210] sm:$0xff]
        %v1634 = vld [vmem:[#allocation4 + $0x218] sm:$0xff]
        %v1635 = vld [vmem:[#allocation4 + $0x220] sm:$0xff]
        %v1636 = vld [vmem:[#allocation4 + $0x228] sm:$0xff]
        %v1637 = vld [vmem:[#allocation4 + $0x230] sm:$0xff]
        %v1638 = vld [vmem:[#allocation4 + $0x238] sm:$0xff]
        %v1639 = vld [vmem:[#allocation4 + $0x240] sm:$0xff]
        %v1640 = vld [vmem:[#allocation4 + $0x248] sm:$0xff]
        %v1641 = vld [vmem:[#allocation4 + $0x250] sm:$0xff]
        %v1642 = vld [vmem:[#allocation4 + $0x258] sm:$0xff]
        %v1643 = vld [vmem:[#allocation4 + $0x260] sm:$0xff]
        %v1644 = vld [vmem:[#allocation4 + $0x268] sm:$0xff]
        %v1645 = vld [vmem:[#allocation4 + $0x270] sm:$0xff]
        %v1646 = vld [vmem:[#allocation4 + $0x278] sm:$0xff]
        %v1647 = vld [vmem:[#allocation4 + $0x280] sm:$0xff]
        %v1648 = vld [vmem:[#allocation4 + $0x288] sm:$0xff]
        %v1649 = vld [vmem:[#allocation4 + $0x290] sm:$0xff]
        %v1650 = vld [vmem:[#allocation4 + $0x298] sm:$0xff]
        %v1651 = vld [vmem:[#allocation4 + $0x2a0] sm:$0xff]
        %v1652 = vld [vmem:[#allocation4 + $0x2a8] sm:$0xff]
        %v1653 = vld [vmem:[#allocation4 + $0x2b0] sm:$0xff]
        %v1654 = vld [vmem:[#allocation4 + $0x2b8] sm:$0xff]
        %v1655 = vld [vmem:[#allocation4 + $0x2c0] sm:$0xff]
        %v1656 = vld [vmem:[#allocation4 + $0x2c8] sm:$0xff]
        %v1657 = vld [vmem:[#allocation4 + $0x2d0] sm:$0xff]
        %v1658 = vld [vmem:[#allocation4 + $0x2d8] sm:$0xff]
        %v1659 = vld [vmem:[#allocation4 + $0x2e0] sm:$0xff]
        %v1660 = vld [vmem:[#allocation4 + $0x2e8] sm:$0xff]
        %v1661 = vld [vmem:[#allocation4 + $0x2f0] sm:$0xff]
        %v1662 = vld [vmem:[#allocation4 + $0x2f8] sm:$0xff]
        %v1663 = vld [vmem:[#allocation4 + $0x300] sm:$0xff]
        %v1664 = vld [vmem:[#allocation4 + $0x308] sm:$0xff]
        %v1665 = vld [vmem:[#allocation4 + $0x310] sm:$0xff]
        %v1666 = vld [vmem:[#allocation4 + $0x318] sm:$0xff]
        %v1667 = vld [vmem:[#allocation4 + $0x320] sm:$0xff]
        %v1668 = vld [vmem:[#allocation4 + $0x328] sm:$0xff]
        %v1669 = vld [vmem:[#allocation4 + $0x330] sm:$0xff]
        %v1670 = vld [vmem:[#allocation4 + $0x338] sm:$0xff]
        %v1671 = vld [vmem:[#allocation4 + $0x340] sm:$0xff]
        %v1672 = vld [vmem:[#allocation4 + $0x348] sm:$0xff]
        %v1673 = vld [vmem:[#allocation4 + $0x350] sm:$0xff]
        %v1674 = vld [vmem:[#allocation4 + $0x358] sm:$0xff]
        %v1675 = vld [vmem:[#allocation4 + $0x360] sm:$0xff]
        %v1676 = vld [vmem:[#allocation4 + $0x368] sm:$0xff]
        %v1677 = vld [vmem:[#allocation4 + $0x370] sm:$0xff]
        %v1678 = vld [vmem:[#allocation4 + $0x378] sm:$0xff]
        %v1679 = vld [vmem:[#allocation4 + $0x380] sm:$0xff]
        %v1680 = vld [vmem:[#allocation4 + $0x388] sm:$0xff]
        %v1681 = vld [vmem:[#allocation4 + $0x390] sm:$0xff]
        %v1682 = vld [vmem:[#allocation4 + $0x398] sm:$0xff]
        %v1683 = vld [vmem:[#allocation4 + $0x3a0] sm:$0xff]
        %v1684 = vld [vmem:[#allocation4 + $0x3a8] sm:$0xff]
        %v1685 = vld [vmem:[#allocation4 + $0x3b0] sm:$0xff]
        %v1686 = vld [vmem:[#allocation4 + $0x3b8] sm:$0xff]
        %v1687 = vld [vmem:[#allocation6 + $0x6] sm:$0x1]
        %v1688 = vlaneseq
        %v1689 = vshrl.u32 %v1688, 7
        %v1690 = vsub.s32 0, %v1689
        %v1691 = vrot.slane %v1687, %v1690
        %v1692 = vsel %vm556, %v1627, 0
        %1694 = vmatprep.subr.mxu0 0.0
        %1695 = vmatpush1.msra.mxu0 %v1631
        %1696 = vmatprep.subr.mxu0 0.0
        %1697 = vmatpush1.msra.mxu0 %v1632
        %1698 = vmatprep.subr.mxu0 0.0
        %1699 = vmatpush1.msra.mxu0 %v1633
        %1700 = vmatprep.subr.mxu0 0.0
        %1701 = vmatpush1.msra.mxu0 %v1634
        %1702 = vmatprep.subr.mxu0 0.0
        %1703 = vmatpush1.msra.mxu0 %v1635
        %1704 = vmatprep.subr.mxu0 0.0
        %1705 = vmatpush1.msra.mxu0 %v1636
        %1706 = vmatprep.subr.mxu0 0.0
        %1707 = vmatpush1.msra.mxu0 %v1637
        %1708 = vmatprep.subr.mxu0 0.0
        %1709 = vmatpush1.msra.mxu0 %v1638
        %1710 = vmatprep.subr.mxu0 0.0
        %1711 = vmatpush1.msra.mxu0 %v1639
        %1712 = vmatprep.subr.mxu0 0.0
        %1713 = vmatpush1.msra.mxu0 %v1640
        %1714 = vmatprep.subr.mxu0 0.0
        %1715 = vmatpush1.msra.mxu0 %v1641
        %1716 = vmatprep.subr.mxu0 0.0
        %1717 = vmatpush1.msra.mxu0 %v1642
        %1718 = vmatprep.subr.mxu0 0.0
        %1719 = vmatpush1.msra.mxu0 %v1643
        %1720 = vmatprep.subr.mxu0 0.0
        %1721 = vmatpush1.msra.mxu0 %v1644
        %1722 = vmatprep.subr.mxu0 0.0
        %1723 = vmatpush1.msra.mxu0 %v1645
        %1724 = vmatprep.subr.mxu0 0.0
        %1725 = vmatpush1.msra.mxu0 %v1646
        %1726 = vmatprep.subr.mxu0 0.0
        %1727 = vmatpush1.msra.mxu0 %v1647
        %1728 = vmatprep.subr.mxu0 0.0
        %1729 = vmatpush1.msra.mxu0 %v1648
        %1730 = vmatprep.subr.mxu0 0.0
        %1731 = vmatpush1.msra.mxu0 %v1649
        %1732 = vmatprep.subr.mxu0 0.0
        %1733 = vmatpush1.msra.mxu0 %v1650
        %1734 = vmatprep.subr.mxu0 0.0
        %1735 = vmatpush1.msra.mxu0 %v1651
        %1736 = vmatprep.subr.mxu0 0.0
        %1737 = vmatpush1.msra.mxu0 %v1652
        %1738 = vmatprep.subr.mxu0 0.0
        %1739 = vmatpush1.msra.mxu0 %v1653
        %1740 = vmatprep.subr.mxu0 0.0
        %1741 = vmatpush1.msra.mxu0 %v1654
        %1742 = vmatprep.subr.mxu0 0.0
        %1743 = vmatpush1.msra.mxu0 %v1655
        %1744 = vmatprep.subr.mxu0 0.0
        %1745 = vmatpush1.msra.mxu0 %v1656
        %1746 = vmatprep.subr.mxu0 0.0
        %1747 = vmatpush1.msra.mxu0 %v1657
        %1748 = vmatprep.subr.mxu0 0.0
        %1749 = vmatpush1.msra.mxu0 %v1658
        %1750 = vmatprep.subr.mxu0 0.0
        %1751 = vmatpush1.msra.mxu0 %v1659
        %1752 = vmatprep.subr.mxu0 0.0
        %1753 = vmatpush1.msra.mxu0 %v1660
        %1754 = vmatprep.subr.mxu0 0.0
        %1755 = vmatpush1.msra.mxu0 %v1661
        %1756 = vmatprep.subr.mxu0 0.0
        %1757 = vmatpush1.msra.mxu0 %v1662
        %1758 = vmatprep.mubr.f32.mxu0 %v1629
        %1759 = vmatmul.mubr.f32.gmra.mrb[0].mxu0 %v1628
        %v1760 = vpop.f32.mrb[0].mxu0
        %v1761 = vadd.f32 %v1691, %v1760
        %v1762 = vpop.f32.mrb[0].mxu0
        %1763 = vdwg.mxu0
        %1764 = vmatprep.subr.mxu0 0.0
        %1765 = vmatpush1.msra.mxu0 %v1663
        %1766 = vmatprep.subr.mxu0 0.0
        %1767 = vmatpush1.msra.mxu0 %v1664
        %1768 = vmatprep.subr.mxu0 0.0
        %1769 = vmatpush1.msra.mxu0 %v1665
        %1770 = vmatprep.subr.mxu0 0.0
        %1771 = vmatpush1.msra.mxu0 %v1666
        %1772 = vmatprep.subr.mxu0 0.0
        %1773 = vmatpush1.msra.mxu0 %v1667
        %1774 = vmatprep.subr.mxu0 0.0
        %1775 = vmatpush1.msra.mxu0 %v1668
        %1776 = vmatprep.subr.mxu0 0.0
        %1777 = vmatpush1.msra.mxu0 %v1669
        %1778 = vmatprep.subr.mxu0 0.0
        %1779 = vmatpush1.msra.mxu0 %v1670
        %1780 = vmatprep.subr.mxu0 0.0
        %1781 = vmatpush1.msra.mxu0 %v1671
        %1782 = vmatprep.subr.mxu0 0.0
        %1783 = vmatpush1.msra.mxu0 %v1672
        %1784 = vmatprep.subr.mxu0 0.0
        %1785 = vmatpush1.msra.mxu0 %v1673
        %1786 = vmatprep.subr.mxu0 0.0
        %1787 = vmatpush1.msra.mxu0 %v1674
        %1788 = vmatprep.subr.mxu0 0.0
        %1789 = vmatpush1.msra.mxu0 %v1675
        %1790 = vmatprep.subr.mxu0 0.0
        %1791 = vmatpush1.msra.mxu0 %v1676
        %1792 = vmatprep.subr.mxu0 0.0
        %1793 = vmatpush1.msra.mxu0 %v1677
        %1794 = vmatprep.subr.mxu0 0.0
        %1795 = vmatpush1.msra.mxu0 %v1678
        %1796 = vmatprep.subr.mxu0 0.0
        %1797 = vmatpush1.msra.mxu0 %v1679
        %1798 = vmatprep.subr.mxu0 0.0
        %1799 = vmatpush1.msra.mxu0 %v1680
        %1800 = vmatprep.subr.mxu0 0.0
        %1801 = vmatpush1.msra.mxu0 %v1681
        %1802 = vmatprep.subr.mxu0 0.0
        %1803 = vmatpush1.msra.mxu0 %v1682
        %1804 = vmatprep.subr.mxu0 0.0
        %1805 = vmatpush1.msra.mxu0 %v1683
        %1806 = vmatprep.subr.mxu0 0.0
        %1807 = vmatpush1.msra.mxu0 %v1684
        %1808 = vmatprep.subr.mxu0 0.0
        %1809 = vmatpush1.msra.mxu0 %v1685
        %1810 = vmatprep.subr.mxu0 0.0
        %1811 = vmatpush1.msra.mxu0 %v1686
        %1812 = vmatprep.subr.mxu0 0.0
        %1813 = vmatpush1.msra.mxu0 0.0
        %1814 = vmatprep.subr.mxu0 0.0
        %1815 = vmatpush1.msra.mxu0 0.0
        %1816 = vmatprep.subr.mxu0 0.0
        %1817 = vmatpush1.msra.mxu0 0.0
        %1818 = vmatprep.subr.mxu0 0.0
        %1819 = vmatpush1.msra.mxu0 0.0
        %1820 = vmatprep.subr.mxu0 0.0
        %1821 = vmatpush1.msra.mxu0 0.0
        %1822 = vmatprep.subr.mxu0 0.0
        %1823 = vmatpush1.msra.mxu0 0.0
        %1824 = vmatprep.subr.mxu0 0.0
        %1825 = vmatpush1.msra.mxu0 0.0
        %1826 = vmatprep.subr.mxu0 0.0
        %1827 = vmatpush1.msra.mxu0 0.0
        %1828 = vmatprep.mubr.f32.mxu0 %v1692
        %1829 = vmatmul.mubr.f32.gmra.mrb[0].mxu0 %v1630
        %v1830 = vpop.f32.mrb[0].mxu0
        %v1831 = vadd.f32 %v1761, %v1830
        %v1832 = vpop.f32.mrb[0].mxu0
        %1833 = vdwg.mxu0
        %v1834 = vmax.f32 %v1831, 0.0
        %1835 = vrot.lane.b32.xlu0 %v1604, 64
        %v1836 = vpop.permute.xlu0 %1835
        %v1838 = vadd.f32 %v1834, %v1836
        %v1839 = vmax.f32 %v1838, 0.0
        %v1841 = vrot.slane %v672, 1
        %1842 = vrot.lane.b32.xlu0 %v1841, 64
        %v1843 = vpop.permute.xlu0 %1842
        %v1845 = vrot.slane %v672, 2
        %v1847 = vrot.slane %v672, 3
        %1848 = vrot.lane.b32.xlu0 %v1847, 64
        %v1849 = vpop.permute.xlu0 %1848
        %v1851 = vrot.slane %v672, 4
        %v1853 = vrot.slane %v672, 5
        %1854 = vrot.lane.b32.xlu0 %v1853, 64
        %v1855 = vpop.permute.xlu0 %1854
        %v1858 = vrot.slane %v1198, 1
        %1859 = vrot.lane.b32.xlu0 %v1858, 64
        %v1860 = vpop.permute.xlu0 %1859
        %v1862 = vrot.slane %v1198, 2
        %1865 = vrot.lane.b32.xlu0 %v1839, 64
        %v1866 = vpop.permute.xlu0 %1865
        %v1868 = vrot.slane %v1839, 1
        %v1869 = vsel %vm556, %v672, %v1843
        %v1870 = vsel %vm556, %v1845, %v1849
        %v1871 = vsel %vm556, %v1851, %v1855
        %v1872 = vsel %vm556, %v1198, %v1860
        %v1873 = vsel %vm556, %v1862, %v1866
        %v1874 = vld [vmem:[#allocation2 + $0x7a0] sm:$0xff]
        %v1875 = vld [vmem:[#allocation2 + $0x7a8] sm:$0xff]
        %v1876 = vld [vmem:[#allocation2 + $0x7b0] sm:$0xff]
        %v1877 = vld [vmem:[#allocation2 + $0x7b8] sm:$0xff]
        %v1878 = vld [vmem:[#allocation2 + $0x7c0] sm:$0xff]
        %v1879 = vld [vmem:[#allocation2 + $0x7c8] sm:$0xff]
        %v1880 = vld [vmem:[#allocation2 + $0x7d0] sm:$0xff]
        %v1881 = vld [vmem:[#allocation2 + $0x7d8] sm:$0xff]
        %v1882 = vld [vmem:[#allocation2 + $0x7e0] sm:$0xff]
        %v1883 = vld [vmem:[#allocation2 + $0x7e8] sm:$0xff]
        %v1884 = vld [vmem:[#allocation2 + $0x7f0] sm:$0xff]
        %v1885 = vld [vmem:[#allocation2 + $0x7f8] sm:$0xff]
        %v1886 = vld [vmem:[#allocation2 + $0x800] sm:$0xff]
        %v1887 = vld [vmem:[#allocation2 + $0x808] sm:$0xff]
        %v1888 = vld [vmem:[#allocation2 + $0x810] sm:$0xff]
        %v1889 = vld [vmem:[#allocation2 + $0x818] sm:$0xff]
        %v1890 = vld [vmem:[#allocation2 + $0x820] sm:$0xff]
        %v1891 = vld [vmem:[#allocation2 + $0x828] sm:$0xff]
        %v1892 = vld [vmem:[#allocation2 + $0x830] sm:$0xff]
        %v1893 = vld [vmem:[#allocation2 + $0x838] sm:$0xff]
        %v1894 = vld [vmem:[#allocation2 + $0x840] sm:$0xff]
        %v1895 = vld [vmem:[#allocation2 + $0x848] sm:$0xff]
        %v1896 = vld [vmem:[#allocation2 + $0x850] sm:$0xff]
        %v1897 = vld [vmem:[#allocation2 + $0x858] sm:$0xff]
        %v1898 = vld [vmem:[#allocation2 + $0x860] sm:$0xff]
        %v1899 = vld [vmem:[#allocation2 + $0x868] sm:$0xff]
        %v1900 = vld [vmem:[#allocation2 + $0x870] sm:$0xff]
        %v1901 = vld [vmem:[#allocation2 + $0x878] sm:$0xff]
        %v1902 = vld [vmem:[#allocation2 + $0x880] sm:$0xff]
        %v1903 = vld [vmem:[#allocation2 + $0x888] sm:$0xff]
        %v1904 = vld [vmem:[#allocation2 + $0x890] sm:$0xff]
        %v1905 = vld [vmem:[#allocation2 + $0x898] sm:$0xff]
        %v1906 = vld [vmem:[#allocation2 + $0x8a0] sm:$0xff]
        %v1907 = vld [vmem:[#allocation2 + $0x8a8] sm:$0xff]
        %v1908 = vld [vmem:[#allocation2 + $0x8b0] sm:$0xff]
        %v1909 = vld [vmem:[#allocation2 + $0x8b8] sm:$0xff]
        %v1910 = vld [vmem:[#allocation2 + $0x8c0] sm:$0xff]
        %v1911 = vld [vmem:[#allocation2 + $0x8c8] sm:$0xff]
        %v1912 = vld [vmem:[#allocation2 + $0x8d0] sm:$0xff]
        %v1913 = vld [vmem:[#allocation2 + $0x8d8] sm:$0xff]
        %v1914 = vld [vmem:[#allocation2 + $0x8e0] sm:$0xff]
        %v1915 = vld [vmem:[#allocation2 + $0x8e8] sm:$0xff]
        %v1916 = vld [vmem:[#allocation2 + $0x8f0] sm:$0xff]
        %v1917 = vld [vmem:[#allocation2 + $0x8f8] sm:$0xff]
        %v1918 = vld [vmem:[#allocation2 + $0x900] sm:$0xff]
        %v1919 = vld [vmem:[#allocation2 + $0x908] sm:$0xff]
        %v1920 = vld [vmem:[#allocation2 + $0x910] sm:$0xff]
        %v1921 = vld [vmem:[#allocation2 + $0x918] sm:$0xff]
        %v1922 = vld [vmem:[#allocation2 + $0x920] sm:$0xff]
        %v1923 = vld [vmem:[#allocation2 + $0x928] sm:$0xff]
        %v1924 = vld [vmem:[#allocation2 + $0x930] sm:$0xff]
        %v1925 = vld [vmem:[#allocation2 + $0x938] sm:$0xff]
        %v1926 = vld [vmem:[#allocation2 + $0x940] sm:$0xff]
        %v1927 = vld [vmem:[#allocation2 + $0x948] sm:$0xff]
        %v1928 = vld [vmem:[#allocation2 + $0x950] sm:$0xff]
        %v1929 = vld [vmem:[#allocation2 + $0x958] sm:$0xff]
        %v1930 = vld [vmem:[#allocation2 + $0x960] sm:$0xff]
        %v1931 = vld [vmem:[#allocation2 + $0x968] sm:$0xff]
        %v1932 = vld [vmem:[#allocation2 + $0x970] sm:$0xff]
        %v1933 = vld [vmem:[#allocation2 + $0x978] sm:$0xff]
        %v1934 = vld [vmem:[#allocation2 + $0x980] sm:$0xff]
        %v1935 = vld [vmem:[#allocation2 + $0x988] sm:$0xff]
        %v1936 = vld [vmem:[#allocation2 + $0x990] sm:$0xff]
        %v1937 = vld [vmem:[#allocation2 + $0x998] sm:$0xff]
        %v1938 = vld [vmem:[#allocation2 + $0x9a0] sm:$0xff]
        %v1939 = vld [vmem:[#allocation2 + $0x9a8] sm:$0xff]
        %v1940 = vld [vmem:[#allocation2 + $0x9b0] sm:$0xff]
        %v1941 = vld [vmem:[#allocation2 + $0x9b8] sm:$0xff]
        %v1942 = vld [vmem:[#allocation2 + $0x9c0] sm:$0xff]
        %v1943 = vld [vmem:[#allocation2 + $0x9c8] sm:$0xff]
        %v1944 = vld [vmem:[#allocation2 + $0x9d0] sm:$0xff]
        %v1945 = vld [vmem:[#allocation2 + $0x9d8] sm:$0xff]
        %v1946 = vld [vmem:[#allocation2 + $0x9e0] sm:$0xff]
        %v1947 = vld [vmem:[#allocation2 + $0x9e8] sm:$0xff]
        %v1948 = vld [vmem:[#allocation2 + $0x9f0] sm:$0xff]
        %v1949 = vld [vmem:[#allocation2 + $0x9f8] sm:$0xff]
        %v1950 = vld [vmem:[#allocation2 + $0xa00] sm:$0xff]
        %v1951 = vld [vmem:[#allocation2 + $0xa08] sm:$0xff]
        %v1952 = vld [vmem:[#allocation2 + $0xa10] sm:$0xff]
        %v1953 = vld [vmem:[#allocation2 + $0xa18] sm:$0xff]
        %v1954 = vld [vmem:[#allocation2 + $0xa20] sm:$0xff]
        %v1955 = vld [vmem:[#allocation2 + $0xa28] sm:$0xff]
        %v1956 = vld [vmem:[#allocation2 + $0xa30] sm:$0xff]
        %v1957 = vld [vmem:[#allocation2 + $0xa38] sm:$0xff]
        %v1958 = vld [vmem:[#allocation2 + $0xa40] sm:$0xff]
        %v1959 = vld [vmem:[#allocation2 + $0xa48] sm:$0xff]
        %v1960 = vld [vmem:[#allocation2 + $0xa50] sm:$0xff]
        %v1961 = vld [vmem:[#allocation2 + $0xa58] sm:$0xff]
        %v1962 = vld [vmem:[#allocation6 + $0x7] sm:$0x1]
        %v1963 = vsel %vm556, %v1868, 0
        %1965 = vmatprep.subr.mxu0 0.0
        %1966 = vmatpush1.msra.mxu0 %v1874
        %1967 = vmatprep.subr.mxu0 0.0
        %1968 = vmatpush1.msra.mxu0 %v1875
        %1969 = vmatprep.subr.mxu0 0.0
        %1970 = vmatpush1.msra.mxu0 %v1876
        %1971 = vmatprep.subr.mxu0 0.0
        %1972 = vmatpush1.msra.mxu0 %v1877
        %1973 = vmatprep.subr.mxu0 0.0
        %1974 = vmatpush1.msra.mxu0 %v1878
        %1975 = vmatprep.subr.mxu0 0.0
        %1976 = vmatpush1.msra.mxu0 %v1879
        %1977 = vmatprep.subr.mxu0 0.0
        %1978 = vmatpush1.msra.mxu0 %v1880
        %1979 = vmatprep.subr.mxu0 0.0
        %1980 = vmatpush1.msra.mxu0 %v1881
        %1981 = vmatprep.subr.mxu0 0.0
        %1982 = vmatpush1.msra.mxu0 %v1882
        %1983 = vmatprep.subr.mxu0 0.0
        %1984 = vmatpush1.msra.mxu0 %v1883
        %1985 = vmatprep.subr.mxu0 0.0
        %1986 = vmatpush1.msra.mxu0 %v1884
        %1987 = vmatprep.subr.mxu0 0.0
        %1988 = vmatpush1.msra.mxu0 %v1885
        %1989 = vmatprep.subr.mxu0 0.0
        %1990 = vmatpush1.msra.mxu0 %v1886
        %1991 = vmatprep.subr.mxu0 0.0
        %1992 = vmatpush1.msra.mxu0 %v1887
        %1993 = vmatprep.subr.mxu0 0.0
        %1994 = vmatpush1.msra.mxu0 %v1888
        %1995 = vmatprep.subr.mxu0 0.0
        %1996 = vmatpush1.msra.mxu0 %v1889
        %1997 = vmatprep.subr.mxu0 0.0
        %1998 = vmatpush1.msra.mxu0 %v1890
        %1999 = vmatprep.subr.mxu0 0.0
        %2000 = vmatpush1.msra.mxu0 %v1891
        %2001 = vmatprep.subr.mxu0 0.0
        %2002 = vmatpush1.msra.mxu0 %v1892
        %2003 = vmatprep.subr.mxu0 0.0
        %2004 = vmatpush1.msra.mxu0 %v1893
        %2005 = vmatprep.subr.mxu0 0.0
        %2006 = vmatpush1.msra.mxu0 %v1894
        %2007 = vmatprep.subr.mxu0 0.0
        %2008 = vmatpush1.msra.mxu0 %v1895
        %2009 = vmatprep.subr.mxu0 0.0
        %2010 = vmatpush1.msra.mxu0 %v1896
        %2011 = vmatprep.subr.mxu0 0.0
        %2012 = vmatpush1.msra.mxu0 %v1897
        %2013 = vmatprep.subr.mxu0 0.0
        %2014 = vmatpush1.msra.mxu0 %v1898
        %2015 = vmatprep.subr.mxu0 0.0
        %2016 = vmatpush1.msra.mxu0 %v1899
        %2017 = vmatprep.subr.mxu0 0.0
        %2018 = vmatpush1.msra.mxu0 %v1900
        %2019 = vmatprep.subr.mxu0 0.0
        %2020 = vmatpush1.msra.mxu0 %v1901
        %2021 = vmatprep.subr.mxu0 0.0
        %2022 = vmatpush1.msra.mxu0 %v1902
        %2023 = vmatprep.subr.mxu0 0.0
        %2024 = vmatpush1.msra.mxu0 %v1903
        %2025 = vmatprep.subr.mxu0 0.0
        %2026 = vmatpush1.msra.mxu0 %v1904
        %2027 = vmatprep.subr.mxu0 0.0
        %2028 = vmatpush1.msra.mxu0 %v1905
        %2029 = vmatprep.mubr.f32.mxu0 %v1870
        %2030 = vmatmul.mubr.f32.gmra.mrb[0].mxu0 %v1869
        %v2031 = vpop.f32.mrb[0].mxu0
        %v2032 = vadd.f32 %v1962, %v2031
        %v2033 = vpop.f32.mrb[0].mxu0
        %2034 = vdwg.mxu0
        %2035 = vmatprep.subr.mxu0 0.0
        %2036 = vmatpush1.msra.mxu0 %v1906
        %2037 = vmatprep.subr.mxu0 0.0
        %2038 = vmatpush1.msra.mxu0 %v1907
        %2039 = vmatprep.subr.mxu0 0.0
        %2040 = vmatpush1.msra.mxu0 %v1908
        %2041 = vmatprep.subr.mxu0 0.0
        %2042 = vmatpush1.msra.mxu0 %v1909
        %2043 = vmatprep.subr.mxu0 0.0
        %2044 = vmatpush1.msra.mxu0 %v1910
        %2045 = vmatprep.subr.mxu0 0.0
        %2046 = vmatpush1.msra.mxu0 %v1911
        %2047 = vmatprep.subr.mxu0 0.0
        %2048 = vmatpush1.msra.mxu0 %v1912
        %2049 = vmatprep.subr.mxu0 0.0
        %2050 = vmatpush1.msra.mxu0 %v1913
        %2051 = vmatprep.subr.mxu0 0.0
        %2052 = vmatpush1.msra.mxu0 %v1914
        %2053 = vmatprep.subr.mxu0 0.0
        %2054 = vmatpush1.msra.mxu0 %v1915
        %2055 = vmatprep.subr.mxu0 0.0
        %2056 = vmatpush1.msra.mxu0 %v1916
        %2057 = vmatprep.subr.mxu0 0.0
        %2058 = vmatpush1.msra.mxu0 %v1917
        %2059 = vmatprep.subr.mxu0 0.0
        %2060 = vmatpush1.msra.mxu0 %v1918
        %2061 = vmatprep.subr.mxu0 0.0
        %2062 = vmatpush1.msra.mxu0 %v1919
        %2063 = vmatprep.subr.mxu0 0.0
        %2064 = vmatpush1.msra.mxu0 %v1920
        %2065 = vmatprep.subr.mxu0 0.0
        %2066 = vmatpush1.msra.mxu0 %v1921
        %2067 = vmatprep.subr.mxu0 0.0
        %2068 = vmatpush1.msra.mxu0 %v1922
        %2069 = vmatprep.subr.mxu0 0.0
        %2070 = vmatpush1.msra.mxu0 %v1923
        %2071 = vmatprep.subr.mxu0 0.0
        %2072 = vmatpush1.msra.mxu0 %v1924
        %2073 = vmatprep.subr.mxu0 0.0
        %2074 = vmatpush1.msra.mxu0 %v1925
        %2075 = vmatprep.subr.mxu0 0.0
        %2076 = vmatpush1.msra.mxu0 %v1926
        %2077 = vmatprep.subr.mxu0 0.0
        %2078 = vmatpush1.msra.mxu0 %v1927
        %2079 = vmatprep.subr.mxu0 0.0
        %2080 = vmatpush1.msra.mxu0 %v1928
        %2081 = vmatprep.subr.mxu0 0.0
        %2082 = vmatpush1.msra.mxu0 %v1929
        %2083 = vmatprep.subr.mxu0 0.0
        %2084 = vmatpush1.msra.mxu0 %v1930
        %2085 = vmatprep.subr.mxu0 0.0
        %2086 = vmatpush1.msra.mxu0 %v1931
        %2087 = vmatprep.subr.mxu0 0.0
        %2088 = vmatpush1.msra.mxu0 %v1932
        %2089 = vmatprep.subr.mxu0 0.0
        %2090 = vmatpush1.msra.mxu0 %v1933
        %2091 = vmatprep.subr.mxu0 0.0
        %2092 = vmatpush1.msra.mxu0 %v1934
        %2093 = vmatprep.subr.mxu0 0.0
        %2094 = vmatpush1.msra.mxu0 %v1935
        %2095 = vmatprep.subr.mxu0 0.0
        %2096 = vmatpush1.msra.mxu0 %v1936
        %2097 = vmatprep.subr.mxu0 0.0
        %2098 = vmatpush1.msra.mxu0 %v1937
        %2099 = vmatprep.mubr.f32.mxu0 %v1872
        %2100 = vmatmul.mubr.f32.gmra.mrb[0].mxu0 %v1871
        %v2101 = vpop.f32.mrb[0].mxu0
        %v2102 = vadd.f32 %v2032, %v2101
        %v2103 = vpop.f32.mrb[0].mxu0
        %2104 = vdwg.mxu0
        %2105 = vmatprep.subr.mxu0 0.0
        %2106 = vmatpush1.msra.mxu0 %v1938
        %2107 = vmatprep.subr.mxu0 0.0
        %2108 = vmatpush1.msra.mxu0 %v1939
        %2109 = vmatprep.subr.mxu0 0.0
        %2110 = vmatpush1.msra.mxu0 %v1940
        %2111 = vmatprep.subr.mxu0 0.0
        %2112 = vmatpush1.msra.mxu0 %v1941
        %2113 = vmatprep.subr.mxu0 0.0
        %2114 = vmatpush1.msra.mxu0 %v1942
        %2115 = vmatprep.subr.mxu0 0.0
        %2116 = vmatpush1.msra.mxu0 %v1943
        %2117 = vmatprep.subr.mxu0 0.0
        %2118 = vmatpush1.msra.mxu0 %v1944
        %2119 = vmatprep.subr.mxu0 0.0
        %2120 = vmatpush1.msra.mxu0 %v1945
        %2121 = vmatprep.subr.mxu0 0.0
        %2122 = vmatpush1.msra.mxu0 %v1946
        %2123 = vmatprep.subr.mxu0 0.0
        %2124 = vmatpush1.msra.mxu0 %v1947
        %2125 = vmatprep.subr.mxu0 0.0
        %2126 = vmatpush1.msra.mxu0 %v1948
        %2127 = vmatprep.subr.mxu0 0.0
        %2128 = vmatpush1.msra.mxu0 %v1949
        %2129 = vmatprep.subr.mxu0 0.0
        %2130 = vmatpush1.msra.mxu0 %v1950
        %2131 = vmatprep.subr.mxu0 0.0
        %2132 = vmatpush1.msra.mxu0 %v1951
        %2133 = vmatprep.subr.mxu0 0.0
        %2134 = vmatpush1.msra.mxu0 %v1952
        %2135 = vmatprep.subr.mxu0 0.0
        %2136 = vmatpush1.msra.mxu0 %v1953
        %2137 = vmatprep.subr.mxu0 0.0
        %2138 = vmatpush1.msra.mxu0 %v1954
        %2139 = vmatprep.subr.mxu0 0.0
        %2140 = vmatpush1.msra.mxu0 %v1955
        %2141 = vmatprep.subr.mxu0 0.0
        %2142 = vmatpush1.msra.mxu0 %v1956
        %2143 = vmatprep.subr.mxu0 0.0
        %2144 = vmatpush1.msra.mxu0 %v1957
        %2145 = vmatprep.subr.mxu0 0.0
        %2146 = vmatpush1.msra.mxu0 %v1958
        %2147 = vmatprep.subr.mxu0 0.0
        %2148 = vmatpush1.msra.mxu0 %v1959
        %2149 = vmatprep.subr.mxu0 0.0
        %2150 = vmatpush1.msra.mxu0 %v1960
        %2151 = vmatprep.subr.mxu0 0.0
        %2152 = vmatpush1.msra.mxu0 %v1961
        %2153 = vmatprep.subr.mxu0 0.0
        %2154 = vmatpush1.msra.mxu0 0.0
        %2155 = vmatprep.subr.mxu0 0.0
        %2156 = vmatpush1.msra.mxu0 0.0
        %2157 = vmatprep.subr.mxu0 0.0
        %2158 = vmatpush1.msra.mxu0 0.0
        %2159 = vmatprep.subr.mxu0 0.0
        %2160 = vmatpush1.msra.mxu0 0.0
        %2161 = vmatprep.subr.mxu0 0.0
        %2162 = vmatpush1.msra.mxu0 0.0
        %2163 = vmatprep.subr.mxu0 0.0
        %2164 = vmatpush1.msra.mxu0 0.0
        %2165 = vmatprep.subr.mxu0 0.0
        %2166 = vmatpush1.msra.mxu0 0.0
        %2167 = vmatprep.subr.mxu0 0.0
        %2168 = vmatpush1.msra.mxu0 0.0
        %2169 = vmatprep.mubr.f32.mxu0 %v1963
        %2170 = vmatmul.mubr.f32.gmra.mrb[0].mxu0 %v1873
        %v2171 = vpop.f32.mrb[0].mxu0
        %v2172 = vadd.f32 %v2102, %v2171
        %v2173 = vpop.f32.mrb[0].mxu0
        %2174 = vdwg.mxu0
        %v2175 = vmax.f32 %v2172, 0.0
        %v2176 = vld [vmem:[#allocation4 + $0x3c0] sm:$0xff]
        %v2177 = vld [vmem:[#allocation4 + $0x3c8] sm:$0xff]
        %v2178 = vld [vmem:[#allocation4 + $0x3d0] sm:$0xff]
        %v2179 = vld [vmem:[#allocation4 + $0x3d8] sm:$0xff]
        %v2180 = vld [vmem:[#allocation4 + $0x3e0] sm:$0xff]
        %v2181 = vld [vmem:[#allocation4 + $0x3e8] sm:$0xff]
        %v2182 = vld [vmem:[#allocation4 + $0x3f0] sm:$0xff]
        %v2183 = vld [vmem:[#allocation4 + $0x3f8] sm:$0xff]
        %v2184 = vld [vmem:[#allocation4 + $0x400] sm:$0xff]
        %v2185 = vld [vmem:[#allocation4 + $0x408] sm:$0xff]
        %v2186 = vld [vmem:[#allocation4 + $0x410] sm:$0xff]
        %v2187 = vld [vmem:[#allocation4 + $0x418] sm:$0xff]
        %v2188 = vld [vmem:[#allocation4 + $0x420] sm:$0xff]
        %v2189 = vld [vmem:[#allocation4 + $0x428] sm:$0xff]
        %v2190 = vld [vmem:[#allocation4 + $0x430] sm:$0xff]
        %v2191 = vld [vmem:[#allocation4 + $0x438] sm:$0xff]
        %v2192 = vld [vmem:[#allocation6 + $0x8] sm:$0x1]
        %2193 = vmatprep.subr.mxu0 0.0
        %2194 = vmatpush1.msra.mxu0 %v2176
        %2195 = vmatprep.subr.mxu0 0.0
        %2196 = vmatpush1.msra.mxu0 %v2177
        %2197 = vmatprep.subr.mxu0 0.0
        %2198 = vmatpush1.msra.mxu0 %v2178
        %2199 = vmatprep.subr.mxu0 0.0
        %2200 = vmatpush1.msra.mxu0 %v2179
        %2201 = vmatprep.subr.mxu0 0.0
        %2202 = vmatpush1.msra.mxu0 %v2180
        %2203 = vmatprep.subr.mxu0 0.0
        %2204 = vmatpush1.msra.mxu0 %v2181
        %2205 = vmatprep.subr.mxu0 0.0
        %2206 = vmatpush1.msra.mxu0 %v2182
        %2207 = vmatprep.subr.mxu0 0.0
        %2208 = vmatpush1.msra.mxu0 %v2183
        %2209 = vmatprep.subr.mxu0 0.0
        %2210 = vmatpush1.msra.mxu0 %v2184
        %2211 = vmatprep.subr.mxu0 0.0
        %2212 = vmatpush1.msra.mxu0 %v2185
        %2213 = vmatprep.subr.mxu0 0.0
        %2214 = vmatpush1.msra.mxu0 %v2186
        %2215 = vmatprep.subr.mxu0 0.0
        %2216 = vmatpush1.msra.mxu0 %v2187
        %2217 = vmatprep.subr.mxu0 0.0
        %2218 = vmatpush1.msra.mxu0 %v2188
        %2219 = vmatprep.subr.mxu0 0.0
        %2220 = vmatpush1.msra.mxu0 %v2189
        %2221 = vmatprep.subr.mxu0 0.0
        %2222 = vmatpush1.msra.mxu0 %v2190
        %2223 = vmatprep.subr.mxu0 0.0
        %2224 = vmatpush1.msra.mxu0 %v2191
        %2225 = vmatprep.subr.mxu0 0.0
        %2226 = vmatpush1.msra.mxu0 0.0
        %2227 = vmatprep.subr.mxu0 0.0
        %2228 = vmatpush1.msra.mxu0 0.0
        %2229 = vmatprep.subr.mxu0 0.0
        %2230 = vmatpush1.msra.mxu0 0.0
        %2231 = vmatprep.subr.mxu0 0.0
        %2232 = vmatpush1.msra.mxu0 0.0
        %2233 = vmatprep.subr.mxu0 0.0
        %2234 = vmatpush1.msra.mxu0 0.0
        %2235 = vmatprep.subr.mxu0 0.0
        %2236 = vmatpush1.msra.mxu0 0.0
        %2237 = vmatprep.subr.mxu0 0.0
        %2238 = vmatpush1.msra.mxu0 0.0
        %2239 = vmatprep.subr.mxu0 0.0
        %2240 = vmatpush1.msra.mxu0 0.0
        %2241 = vmatprep.subr.mxu0 0.0
        %2242 = vmatpush1.msra.mxu0 0.0
        %2243 = vmatprep.subr.mxu0 0.0
        %2244 = vmatpush1.msra.mxu0 0.0
        %2245 = vmatprep.subr.mxu0 0.0
        %2246 = vmatpush1.msra.mxu0 0.0
        %2247 = vmatprep.subr.mxu0 0.0
        %2248 = vmatpush1.msra.mxu0 0.0
        %2249 = vmatprep.subr.mxu0 0.0
        %2250 = vmatpush1.msra.mxu0 0.0
        %2251 = vmatprep.subr.mxu0 0.0
        %2252 = vmatpush1.msra.mxu0 0.0
        %2253 = vmatprep.subr.mxu0 0.0
        %2254 = vmatpush1.msra.mxu0 0.0
        %2255 = vmatprep.subr.mxu0 0.0
        %2256 = vmatpush1.msra.mxu0 0.0
        %2257 = vmatprep.mubr.f32.mxu0 0.0
        %2258 = vmatmul.mubr.f32.gmra.mrb[0].mxu0 %v2175
        %v2259 = vpop.f32.mrb[0].mxu0
        %v2260 = vadd.f32 %v2192, %v2259
        %v2261 = vpop.f32.mrb[0].mxu0
        %2262 = vdwg.mxu0
        %v2263 = vmax.f32 %v2260, 0.0
        %v2264 = vld [vmem:[#allocation6 + $0x9] sm:$0x1]
        %v2265 = vmul.f32 %v2263, %v2264
        %vm2266 = vcmask 253952
        %v2267 = vsel %vm2266, %v2265, 0.0
        %2268 = vadd.xlane.f32.xlu0 %v2267
        %v2269 = vpop.xlane.xlu0 %2268
        %v2270 = vld [vmem:[#allocation6 + $0xa] sm:$0x1]
        %v2271 = vadd.f32 %v2269, %v2270
        %2273 = vset.pattern.permute.xlu0 0
        %2274 = vperm.xlu0 %2273, %v2271
        %v2275 = vpop.permute.xlu0 %2274
        %2277 = vst [vmem:[%s237] sm:$0x1] %v2275
        %p2278 = scmp.lt.s32.totalorder %s17, 1
        %s2279 = scalar_select %p2278, %s17, 1
        %s2280 = scalar_lea.vmem %s4, %s2279
        // Predicated region
        $region49: #{_lambda_.1} parent=35 // pred_check
          %p2281 = pneg %p124
        $region50: #{_lambda_.1} parent=35 // pred_check_branch
          %2283 = sbr.rel (%p2281) target = $region52
        $region51: #{_lambda_.1} parent=35 // pred_region
          _
        $region52: #{_lambda_.1} parent=35 // pred_fallthru
          _
      $region36: #{_lambda_.1} parent=5 // pred_fallthru
        _
      %p2284 = scmp.le.s32.totalorder 2, %s12
      // Predicated region
      $region53: #{_lambda_.1} parent=5 // pred_check
        %p2285 = pneg %p2284
      $region54: #{_lambda_.1} parent=5 // pred_check_branch
        %2287 = sbr.rel (%p2285) target = $region56
      $region55: #{_lambda_.1} parent=5 // pred_region
        %s2288 = ssub.s32 %s12, 2
        // Predicated region
        $region57: #{_lambda_.1} parent=55 // pred_check
          %p2289 = pneg %p130
        $region58: #{_lambda_.1} parent=55 // pred_check_branch
          %2291 = sbr.rel (%p2289) target = $region60
        $region59: #{_lambda_.1} parent=55 // pred_region
          %p2292 = scmp.lt.s32.totalorder %s18, 1
          %s2293 = scalar_select %p2292, %s18, 1
          %s2294 = scalar_lea.vmem %s4, %s2293
        $region60: #{_lambda_.1} parent=55 // pred_fallthru
          _
      $region56: #{_lambda_.1} parent=5 // pred_fallthru
        _
    $region6: #{_lambda_.1} parent=1 // loop_footer
      %s16 = sadd.s32 1, %s12
    $region7: #{_lambda_.1} parent=1 // loop_footer_branch
      %11 = sbr.rel target = $region3
    $region8: #{_lambda_.1} parent=1 // loop_exit
      _
    %2295 = vsyncpa [#allocation3], 1
    %s2296 = scalar_lea.sflag [#allocation3], 1
    %2297 = vsyncpa %s2296, 1
    %2298 = vsyncpa [#allocation5], 1

</llo_original>
